<compile_context>
chip_gen: v7x
topology: tpu7x:2x2x1
jax: 0.10.0
libtpu: 0.0.40
codegen_flags: <defaults>
</compile_context>

<pallas_src>
import functools

import numpy as np
import jax
import jax.numpy as jnp
from jax import lax
from jax.experimental import pallas as pl
from jax.experimental.pallas import tpu as pltpu

_EPS = 1e-6        # torch.nn.PairwiseDistance eps (only used in host-side merge_center now)
_NPAD = 1024       # padded number of sampled points (sample_num = 1000 <= 1024)
_CPAD = 8          # coord padding (xyz + prob column fit in 8; lane-masked stores are tiny)
_TM = 128          # seed-axis tile (128 keeps >=2 tiles alive for v7x megacore balance)
_MAX_SEED_TILES = 8   # ceil(anchor_num**3 / _TM) = ceil(1000/128) = 8
_TQ_MAX = 8192     # pixel-axis tile for the cluster kernel (safe on all generations)


def _round_up(x, m):
    return ((x + m - 1) // m) * m


def _next_pow2(n):
    return 1 if n <= 1 else 1 << (n - 1).bit_length()


def _vmem_limit_bytes():
    # Generation-aware: every kernel below needs well under 16 MiB, so cap at 32 MiB which is
    # <= half of v7x's 64 MiB physical VMEM and leaves double-buffering headroom everywhere.
    cap = 64 * 1024 * 1024
    try:
        cap = int(getattr(pltpu.get_tpu_info(), "vmem_capacity_bytes", cap))
    except Exception:
        pass
    return int(min(max(cap // 2, 16 * 1024 * 1024), 32 * 1024 * 1024))


_COMPILER_PARAMS = pltpu.CompilerParams(
    dimension_semantics=("parallel",),
    vmem_limit_bytes=_vmem_limit_bytes())


def _fast_recip(x):
    # EUP approximate reciprocal + one Newton step: stays off the multi-op VALU divide path
    # while matching the exact quotient to ~f32 precision.
    r = pl.reciprocal(x, approx=True)
    return r * (2.0 - x * r)


# ----------------------------- Pallas kernels -----------------------------

def _count_kernel(seeds_ref, pts_t_ref, psq_ref, prob_ref, counts_ref, *, bandwidth):
    # seeds: (TM, 8) [cols 0..2 = xyz], pts_t: (8, NPAD) [rows 0..2 = xyz^T],
    # psq: (1, NPAD) = |p|^2, prob: (1, NPAD)  ->  counts: (TM, 1)
    s = seeds_ref[...]
    sp = jnp.dot(s, pts_t_ref[...], preferred_element_type=jnp.float32)     # MXU
    s_sq = s[:, 0:1] * s[:, 0:1] + s[:, 1:2] * s[:, 1:2] + s[:, 2:3] * s[:, 2:3]
    d2 = (s_sq + psq_ref[...]) - 2.0 * sp
    # compare squared distances (no sqrt); fold prob directly into the select.
    # d2 can go slightly negative from cancellation — harmless for the `<` comparison.
    thres = jnp.where(d2 < bandwidth * bandwidth, prob_ref[...], 0.0)
    counts_ref[...] = jnp.sum(thres, axis=1, keepdims=True)


def _shift_kernel(seeds_ref, pts_t_ref, pts_mat_ref, psq_ref, prob_ref,
                  out_ref, counts_ref, *, bandwidth, iters):
    # seeds: (TM, 8) [cols 0..2 = xyz], pts_t: (8, NPAD) [rows 0..2 = xyz^T],
    # pts_mat: (NPAD, 8) [cols 0..2 = prob*xyz, col 3 = prob], psq: (1, NPAD), prob: (1, NPAD)
    #   ->  out: (TM, 8) (cols 0..2 = shifted xyz), counts: (TM, 1) post-shift counts (fused).
    inv = -0.5 / (bandwidth * bandwidth)
    g = 1.0 / (bandwidth * bandwidth)            # = -2*inv
    pts_g = pts_t_ref[...] * g                   # once per block, not per iteration
    psq_inv = psq_ref[...] * inv
    pts_mat = pts_mat_ref[...]

    def body(_, seeds):
        # logits = inv*d^2 = inv*|s|^2 + inv*|p|^2 + g*<s,p>.  The Gaussian coefficient and the
        # explicit row normalization cancel, so w = exp(logits); prob and the row sum come out
        # of the MXU for free via the prob-weighted points matrix (col 3 = prob).
        s_sq = (seeds[:, 0:1] * seeds[:, 0:1] + seeds[:, 1:2] * seeds[:, 1:2]
                + seeds[:, 2:3] * seeds[:, 2:3]) * inv                         # (TM, 1)
        gsp = jnp.dot(seeds, pts_g, preferred_element_type=jnp.float32)        # (TM, NPAD)
        w = jnp.exp((gsp + psq_inv) + s_sq)                                    # EUP exp only
        acc = jnp.dot(w, pts_mat, preferred_element_type=jnp.float32)          # (TM, 8)
        denom = jnp.maximum(acc[:, 3:4], 1e-30)  # floor: insurance against all-underflow rows
        return acc * _fast_recip(denom)          # col 3 becomes ~1; ignored by next iteration

    final = lax.fori_loop(0, iters, body, seeds_ref[...])   # serially dependent: no unroll
    out_ref[...] = final

    # Fused post-shift count: reuse the resident pts_t/psq/prob on the final seed positions so
    # the follow-up filter_seed(min_count=10) needs no extra kernel launch / transfers.
    sp = jnp.dot(final, pts_t_ref[...], preferred_element_type=jnp.float32)
    s_sq = (final[:, 0:1] * final[:, 0:1] + final[:, 1:2] * final[:, 1:2]
            + final[:, 2:3] * final[:, 2:3])
    d2 = (s_sq + psq_ref[...]) - 2.0 * sp
    thres = jnp.where(d2 < bandwidth * bandwidth, prob_ref[...], 0.0)
    counts_ref[...] = jnp.sum(thres, axis=1, keepdims=True)


def _cluster_kernel(emb_t_ref, centers_ref, csq_ref, mask_ref, seg_t_ref):
    # emb_t: (8, TQ) [rows 0..2 = xyz^T, lane-dense along pixels], centers: (KPAD, 8),
    # csq: (KPAD, 1) = |c|^2, mask: (KPAD, 1)  ->  seg_t: (KPAD, TQ), columns sum to 1 over
    # valid centers.  Output is lane-dense (TQ multiple of 128) -> unmasked stores.
    e = emb_t_ref[...]
    ce = jnp.dot(centers_ref[...], e, preferred_element_type=jnp.float32)    # MXU (KPAD, TQ)
    e_sq = e[0:1, :] * e[0:1, :] + e[1:2, :] * e[1:2, :] + e[2:3, :] * e[2:3, :]
    d2 = jnp.maximum((csq_ref[...] + e_sq) - 2.0 * ce, 0.0)
    # softmax(1/(d+0.01)) with the per-column max replaced by a clamp: valid logits are >= 0 so
    # the denominator is >= 1; exp(80) stays finite in f32.  Deviates from the exact softmax only
    # when a pixel is within ~1.5e-3 of a center, where the result is one-hot anyway.
    logits = jnp.minimum(_fast_recip(jnp.sqrt(d2) + 0.01), 80.0)
    ex = jnp.where(mask_ref[...] > 0.0, jnp.exp(logits), 0.0)
    seg_t_ref[...] = ex * _fast_recip(jnp.sum(ex, axis=0, keepdims=True))


# ------------------------------- module port -------------------------------

class BinMeanShiftNormalPallas:

    def __init__(self, train_iter=5, test_iter=10, bandwidth=0.5):
        self.train_iter = train_iter
        self.test_iter = test_iter
        self.bandwidth = bandwidth / 2.0
        self.anchor_num = 10
        self.sample_num = 1000

        self._count_calls = {}     # keyed by number of seed tiles
        self._shift_calls = {}     # keyed by (iters, number of seed tiles)
        self._cluster_calls = {}   # keyed by (hw_pad, tq, kpad)

    # ------------------------- cached pallas_calls -------------------------

    def _get_count_call(self, ntiles):
        if ntiles not in self._count_calls:
            m_pad = ntiles * _TM
            self._count_calls[ntiles] = jax.jit(pl.pallas_call(
                functools.partial(_count_kernel, bandwidth=self.bandwidth),
                out_shape=jax.ShapeDtypeStruct((m_pad, 1), jnp.float32),
                grid=(ntiles,),
                in_specs=[pl.BlockSpec((_TM, _CPAD), lambda i: (i, 0)),
                          pl.BlockSpec((_CPAD, _NPAD), lambda i: (0, 0)),
                          pl.BlockSpec((1, _NPAD), lambda i: (0, 0)),
                          pl.BlockSpec((1, _NPAD), lambda i: (0, 0))],
                out_specs=pl.BlockSpec((_TM, 1), lambda i: (i, 0)),
                compiler_params=_COMPILER_PARAMS))
        return self._count_calls[ntiles]

    def _get_shift_call(self, iters, ntiles):
        key = (iters, ntiles)
        if key not in self._shift_calls:
            m_pad = ntiles * _TM
            self._shift_calls[key] = jax.jit(pl.pallas_call(
                functools.partial(_shift_kernel, bandwidth=self.bandwidth, iters=iters),
                out_shape=(jax.ShapeDtypeStruct((m_pad, _CPAD), jnp.float32),
                           jax.ShapeDtypeStruct((m_pad, 1), jnp.float32)),
                grid=(ntiles,),
                in_specs=[pl.BlockSpec((_TM, _CPAD), lambda i: (i, 0)),
                          pl.BlockSpec((_CPAD, _NPAD), lambda i: (0, 0)),
                          pl.BlockSpec((_NPAD, _CPAD), lambda i: (0, 0)),
                          pl.BlockSpec((1, _NPAD), lambda i: (0, 0)),
                          pl.BlockSpec((1, _NPAD), lambda i: (0, 0))],
                out_specs=(pl.BlockSpec((_TM, _CPAD), lambda i: (i, 0)),
                           pl.BlockSpec((_TM, 1), lambda i: (i, 0))),
                compiler_params=_COMPILER_PARAMS))
        return self._shift_calls[key]

    def _get_cluster_call(self, hw_pad, tq, kpad):
        key = (hw_pad, tq, kpad)
        if key not in self._cluster_calls:
            self._cluster_calls[key] = jax.jit(pl.pallas_call(
                _cluster_kernel,
                out_shape=jax.ShapeDtypeStruct((kpad, hw_pad), jnp.float32),
                grid=(hw_pad // tq,),
                in_specs=[pl.BlockSpec((_CPAD, tq), lambda i: (0, i)),
                          pl.BlockSpec((kpad, _CPAD), lambda i: (0, 0)),
                          pl.BlockSpec((kpad, 1), lambda i: (0, 0)),
                          pl.BlockSpec((kpad, 1), lambda i: (0, 0))],
                out_specs=pl.BlockSpec((kpad, tq), lambda i: (0, i)),
                compiler_params=_COMPILER_PARAMS))
        return self._cluster_calls[key]

    # --------------------------- helpers (glue) ---------------------------

    def generate_seed(self, point):
        k = self.anchor_num
        mins = point.min(axis=0)
        maxs = point.max(axis=0)

        def get_start_end(a, b):
            return a + (b - a) / ((k + 1) * 2), b - (b - a) / ((k + 1) * 2)

        axes = []
        for d in range(3):
            s, e = get_start_end(float(mins[d]), float(maxs[d]))
            axes.append(np.linspace(s, e, k, dtype=np.float32))
        X, Y, Z = np.meshgrid(axes[0], axes[1], axes[2], indexing="ij")
        return np.stack([X.ravel(), Y.ravel(), Z.ravel()], axis=1).astype(np.float32)

    @staticmethod
    def _pad_seeds(seeds):
        # Pad the seed count to a power-of-two number of _TM tiles: the grid tracks the real
        # seed count (no fixed 1024 padding) while bounding the number of compiled variants.
        m = seeds.shape[0]
        ntiles = min(_MAX_SEED_TILES, _next_pow2((m + _TM - 1) // _TM))
        m_pad = ntiles * _TM
        pad = np.zeros((m_pad, _CPAD), np.float32)
        pad[:m, :3] = seeds
        pad[m:, :3] = seeds[0]          # padded rows duplicate a real seed (benign; sliced off)
        return pad, ntiles

    def filter_seed(self, seeds, pts_t_dev, psq_dev, prob_dev, min_count):
        m = seeds.shape[0]
        if m == 0:
            return seeds
        seeds_pad, ntiles = self._pad_seeds(seeds)
        counts = np.asarray(self._get_count_call(ntiles)(
            jnp.asarray(seeds_pad), pts_t_dev, psq_dev, prob_dev))[:m, 0]
        return seeds[counts > min_count]

    def shift_and_filter(self, seeds, pts_t_dev, pts_mat_dev, psq_dev, prob_dev,
                         iters, min_count):
        # Shift + fused post-shift count in a single pallas_call, then filter on host.
        m = seeds.shape[0]
        seeds_pad, ntiles = self._pad_seeds(seeds)
        shifted, counts = self._get_shift_call(iters, ntiles)(
            jnp.asarray(seeds_pad), pts_t_dev, pts_mat_dev, psq_dev, prob_dev)
        shifted = np.asarray(shifted)[:m, :3]
        counts = np.asarray(counts)[:m, 0]
        return shifted[counts > min_count]

    def merge_center(self, seed_point, bandwidth):
        # TODO(synk): sequential greedy merge — data-dependent loop, stays on host numpy
        # (the PyTorch reference also runs this loop on host).
        n = seed_point.shape[0]
        diff = seed_point[:, None, :] - seed_point[None, :, :] + _EPS
        dist = np.sqrt((diff * diff).sum(-1))
        intensity = (dist < bandwidth).astype(np.float32).sum(axis=1)
        indices = np.argsort(-intensity, kind="stable")
        is_center = np.ones(n, dtype=bool)
        labels = np.zeros(n, dtype=np.int32)
        cur_label = 0
        for i in range(n):
            if is_center[i]:
                labels[indices[i]] = cur_label
                for j in range(i + 1, n):
                    if is_center[j] and dist[indices[i], indices[j]] < bandwidth:
                        is_center[j] = False
                        labels[indices[j]] = cur_label
                cur_label += 1
        num_labels = int(labels.max()) + 1
        onehot = np.zeros((n, num_labels), np.float32)
        onehot[np.arange(n), labels] = 1.0
        weight = onehot / onehot.sum(axis=0, keepdims=True)
        return (weight.T @ seed_point).astype(np.float32)

    def cluster(self, emb_t_dev, hw, hw_pad, tq, center):
        K = center.shape[0]
        kpad = max(8, _round_up(K, 8))
        centers_mat = np.zeros((kpad, _CPAD), np.float32)
        centers_mat[:K, :3] = center
        csq = np.zeros((kpad, 1), np.float32)
        csq[:K, 0] = (center * center).sum(axis=1)
        mask = np.zeros((kpad, 1), np.float32)
        mask[:K, 0] = 1.0
        seg_t = self._get_cluster_call(hw_pad, tq, kpad)(
            emb_t_dev, jnp.asarray(centers_mat), jnp.asarray(csq), jnp.asarray(mask))
        # (KPAD, hw_pad) -> (HW, K); rows of the result sum to 1 over valid centers.
        return jnp.transpose(seg_t[:K, :hw])

    # ------------------------------ bin_shift ------------------------------

    def bin_shift(self, prob, embedding, param, gt_seg, rng, iters):
        c, h, w = embedding.shape
        hw = h * w
        emb_flat = embedding.reshape(c, hw).astype(np.float32)       # (3, HW)
        param_flat = param.reshape(3, hw).astype(np.float32)
        prob_flat = prob.reshape(hw, 1).astype(np.float32)
        seg = gt_seg.reshape(-1)

        valid = np.arange(hw)[seg != 20]
        rand_index = rng.choice(valid, self.sample_num)
        sample_embedding = emb_flat[:, rand_index].T                  # (N, 3)
        sample_prob = prob_flat[rand_index]                           # (N, 1)
        sample_param = param_flat[:, rand_index]                      # (3, N)

        # Padded sample-point tensors, uploaded ONCE and shared by count / shift kernels.
        pts_t = np.zeros((_CPAD, _NPAD), np.float32)
        pts_t[:3, :self.sample_num] = sample_embedding.T
        psq = np.zeros((1, _NPAD), np.float32)
        psq[0, :self.sample_num] = (sample_embedding * sample_embedding).sum(axis=1)
        prob_row = np.zeros((1, _NPAD), np.float32)
        prob_row[0, :self.sample_num] = sample_prob[:, 0]
        pts_mat = np.zeros((_NPAD, _CPAD), np.float32)                # prob-weighted points
        pts_mat[:self.sample_num, :3] = sample_embedding * sample_prob
        pts_mat[:self.sample_num, 3] = sample_prob[:, 0]              # "ones" column -> row sums

        pts_t_dev = jnp.asarray(pts_t)
        psq_dev = jnp.asarray(psq)
        prob_dev = jnp.asarray(prob_row)
        pts_mat_dev = jnp.asarray(pts_mat)

        seed_point = self.generate_seed(sample_embedding)
        seed_point = self.filter_seed(seed_point, pts_t_dev, psq_dev, prob_dev, min_count=3)
        if seed_point.size <= 0:
            return None, None, None, None, None, None
        # mean-shift iterations + fused post-shift count (filter_seed(min_count=10) folded in)
        seed_point = self.shift_and_filter(seed_point, pts_t_dev, pts_mat_dev, psq_dev,
                                           prob_dev, iters, min_count=10)
        if seed_point.size <= 0:
            return None, None, None, None, None, None
        center = self.merge_center(seed_point, bandwidth=self.bandwidth)

        # Lane-dense transposed embedding layout for the (HBM-bound) cluster kernel.
        hw128 = _round_up(hw, 128)
        tq = min(_TQ_MAX, hw128)
        hw_pad = _round_up(hw128, tq)
        emb_t = np.zeros((_CPAD, hw_pad), np.float32)
        emb_t[:3, :hw] = emb_flat
        segmentation = self.cluster(jnp.asarray(emb_t), hw, hw_pad, tq, center)   # jnp (HW, K)
        sampled_segmentation = segmentation[rand_index]                            # jnp (N, K)
        return (segmentation, sampled_segmentation, center, sample_prob,
                seg[rand_index].reshape(-1, 1), sample_param)

    # ------------------------------- forward -------------------------------

    def forward(self, logit, embedding, param, gt_seg, seed=0, training=True):
        logit = np.asarray(logit, np.float32)
        embedding = np.asarray(embedding, np.float32)
        param = np.asarray(param, np.float32)
        gt_seg = np.asarray(gt_seg)
        batch_size, c, h, w = embedding.shape
        # TODO(synk): the reference asserts c == 2 but its own math (generate_seed /
        # cal_distance_matrix) requires 3-d "normal" embeddings; we use c == 3.
        assert c == 3
        iters = self.train_iter if training else self.test_iter
        rng = np.random.default_rng(seed)
        segs, ssegs, centers, probs, gts, params = [], [], [], [], [], []
        for b in range(batch_size):
            prob = 1.0 / (1.0 + np.exp(-logit[b]))        # sigmoid(logit[b])
            out = self.bin_shift(prob, embedding[b], param[b], gt_seg[b], rng, iters)
            segmentation, sampled_seg, center, sample_prob, sample_seg, sample_param = out
            segs.append(segmentation)
            ssegs.append(sampled_seg)
            centers.append(center)
            probs.append(sample_prob)
            gts.append(sample_seg)
            params.append(sample_param)
        # same ordering as the PyTorch module
        return segs, ssegs, params, centers, probs, gts


# --------------------------------- driver ---------------------------------

if __name__ == "__main__":
    key = jax.random.PRNGKey(0)
    B, C, H, W = 2, 3, 16, 16
    k1, k2, k3, k4 = jax.random.split(key, 4)
    logit = jax.random.normal(k1, (B, 1, H, W), jnp.float32)
    embedding = 0.4 * jax.random.normal(k2, (B, C, H, W), jnp.float32)
    param = jax.random.normal(k3, (B, 3, H, W), jnp.float32)
    gt_seg = jax.random.randint(k4, (B, H, W), 0, 5)

    model = BinMeanShiftNormalPallas(train_iter=5, test_iter=10, bandwidth=0.5)
    segs, ssegs, params, centers, probs, gts = model.forward(
        np.asarray(logit), np.asarray(embedding), np.asarray(param), np.asarray(gt_seg))

    blocked = False
    for seg, sseg in zip(segs, ssegs):
        if seg is not None:
            jax.block_until_ready(seg)
            jax.block_until_ready(sseg)
            blocked = True
    if not blocked:
        # still explicitly block on a Pallas kernel result
        dummy = model._get_count_call(_MAX_SEED_TILES)(
            jnp.zeros((_MAX_SEED_TILES * _TM, _CPAD), jnp.float32),
            jnp.zeros((_CPAD, _NPAD), jnp.float32),
            jnp.zeros((1, _NPAD), jnp.float32),
            jnp.zeros((1, _NPAD), jnp.float32))
        jax.block_until_ready(dummy)
    print("KERNEL_OK")
</pallas_src>

<mosaic_0001>
module attributes {stable_mosaic.version = 11 : i64} {
  func.func @_count_kernel(%arg0: i32, %arg1: memref<128x8xf32, #tpu.memory_space<vmem>>, %arg2: memref<8x1024xf32, #tpu.memory_space<vmem>>, %arg3: memref<1x1024xf32, #tpu.memory_space<vmem>>, %arg4: memref<1x1024xf32, #tpu.memory_space<vmem>>, %arg5: memref<128x1xf32, #tpu.memory_space<vmem>>) attributes {dimension_semantics = [#tpu.dimension_semantics<parallel>], iteration_bounds = array<i64: 8>, scalar_prefetch = 0 : i64, scratch_operands = 0 : i64, tpu.core_type = #tpu.core_type<tc>, window_params = [{transform_indices = @transform_0, window_bounds = array<i64: 128, 8>}, {pipeline_mode = #tpu.pipeline_mode<synchronous>, transform_indices = @transform_1, window_bounds = array<i64: 8, 1024>}, {pipeline_mode = #tpu.pipeline_mode<synchronous>, transform_indices = @transform_2, window_bounds = array<i64: 1, 1024>}, {pipeline_mode = #tpu.pipeline_mode<synchronous>, transform_indices = @transform_3, window_bounds = array<i64: 1, 1024>}, {transform_indices = @transform_4, window_bounds = array<i64: 128, 1>}]} {
    %c0 = arith.constant 0 : index
    %c0_0 = arith.constant 0 : index
    %0 = vector.load %arg1[%c0, %c0_0] : memref<128x8xf32, #tpu.memory_space<vmem>>, vector<128x8xf32>
    %c0_1 = arith.constant 0 : index
    %c0_2 = arith.constant 0 : index
    %1 = vector.load %arg2[%c0_1, %c0_2] : memref<8x1024xf32, #tpu.memory_space<vmem>>, vector<8x1024xf32>
    %cst = arith.constant dense<0.000000e+00> : vector<128x1024xf32>
    %2 = tpu.matmul %0, %1, %cst {dimension_numbers = #tpu.dot_dimension_numbers<[1], [0], [0], [1], [0, 0, 1, 1], [], []>} : vector<128x8xf32>, vector<8x1024xf32>, vector<128x1024xf32> -> vector<128x1024xf32>
    %3 = vector.extract_strided_slice %0 {offsets = [0, 0], sizes = [128, 1], strides = [1, 1]} : vector<128x8xf32> to vector<128x1xf32>
    %4 = vector.extract_strided_slice %0 {offsets = [0, 0], sizes = [128, 1], strides = [1, 1]} : vector<128x8xf32> to vector<128x1xf32>
    %5 = arith.mulf %3, %4 : vector<128x1xf32>
    %6 = vector.extract_strided_slice %0 {offsets = [0, 1], sizes = [128, 1], strides = [1, 1]} : vector<128x8xf32> to vector<128x1xf32>
    %7 = vector.extract_strided_slice %0 {offsets = [0, 1], sizes = [128, 1], strides = [1, 1]} : vector<128x8xf32> to vector<128x1xf32>
    %8 = arith.mulf %6, %7 : vector<128x1xf32>
    %9 = arith.addf %5, %8 : vector<128x1xf32>
    %10 = vector.extract_strided_slice %0 {offsets = [0, 2], sizes = [128, 1], strides = [1, 1]} : vector<128x8xf32> to vector<128x1xf32>
    %11 = vector.extract_strided_slice %0 {offsets = [0, 2], sizes = [128, 1], strides = [1, 1]} : vector<128x8xf32> to vector<128x1xf32>
    %12 = arith.mulf %10, %11 : vector<128x1xf32>
    %13 = arith.addf %9, %12 : vector<128x1xf32>
    %c0_3 = arith.constant 0 : index
    %c0_4 = arith.constant 0 : index
    %14 = vector.load %arg3[%c0_3, %c0_4] : memref<1x1024xf32, #tpu.memory_space<vmem>>, vector<1x1024xf32>
    %15 = vector.broadcast %13 : vector<128x1xf32> to vector<128x1024xf32>
    %16 = vector.broadcast %14 : vector<1x1024xf32> to vector<128x1024xf32>
    %17 = arith.addf %15, %16 : vector<128x1024xf32>
    %cst_5 = arith.constant 2.000000e+00 : f32
    %18 = vector.broadcast %cst_5 : f32 to vector<128x1024xf32>
    %19 = arith.mulf %18, %2 : vector<128x1024xf32>
    %20 = arith.subf %17, %19 : vector<128x1024xf32>
    %cst_6 = arith.constant 6.250000e-02 : f32
    %21 = vector.broadcast %cst_6 : f32 to vector<128x1024xf32>
    %22 = arith.cmpf olt, %20, %21 : vector<128x1024xf32>
    %c0_7 = arith.constant 0 : index
    %c0_8 = arith.constant 0 : index
    %23 = vector.load %arg4[%c0_7, %c0_8] : memref<1x1024xf32, #tpu.memory_space<vmem>>, vector<1x1024xf32>
    %cst_9 = arith.constant 0.000000e+00 : f32
    %24 = vector.shape_cast %23 : vector<1x1024xf32> to vector<1x1024xf32>
    %25 = vector.broadcast %24 : vector<1x1024xf32> to vector<128x1024xf32>
    %26 = vector.broadcast %cst_9 : f32 to vector<128x1024xf32>
    %27 = arith.select %22, %25, %26 : vector<128x1024xi1>, vector<128x1024xf32>
    %cst_10 = arith.constant dense<0.000000e+00> : vector<128xf32>
    %28 = vector.multi_reduction <add>, %27, %cst_10 [1] : vector<128x1024xf32> to vector<128xf32>
    %29 = vector.shape_cast %28 : vector<128xf32> to vector<128x1xf32>
    %c0_11 = arith.constant 0 : index
    %c0_12 = arith.constant 0 : index
    %30 = vector.load %arg5[%c0_11, %c0_12] : memref<128x1xf32, #tpu.memory_space<vmem>>, vector<128x1xf32>
    tpu.vector_store %arg5[%c0_11, %c0_12], %29 {strides = array<i32>} : memref<128x1xf32, #tpu.memory_space<vmem>>, vector<128x1xf32>,
    return
  }
  func.func @transform_0(%arg0: i32) -> (i32, i32) {
    %c0_i32 = arith.constant 0 : i32
    %c0_i32_0 = arith.constant 0 : i32
    return %arg0, %c0_i32 : i32, i32
  }
  func.func @transform_1(%arg0: i32) -> (i32, i32) {
    %c0_i32 = arith.constant 0 : i32
    %c0_i32_0 = arith.constant 0 : i32
    %c0_i32_1 = arith.constant 0 : i32
    return %c0_i32, %c0_i32_0 : i32, i32
  }
  func.func @transform_2(%arg0: i32) -> (i32, i32) {
    %c0_i32 = arith.constant 0 : i32
    %c0_i32_0 = arith.constant 0 : i32
    %c0_i32_1 = arith.constant 0 : i32
    return %c0_i32, %c0_i32_0 : i32, i32
  }
  func.func @transform_3(%arg0: i32) -> (i32, i32) {
    %c0_i32 = arith.constant 0 : i32
    %c0_i32_0 = arith.constant 0 : i32
    %c0_i32_1 = arith.constant 0 : i32
    return %c0_i32, %c0_i32_0 : i32, i32
  }
  func.func @transform_4(%arg0: i32) -> (i32, i32) {
    %c0_i32 = arith.constant 0 : i32
    %c0_i32_0 = arith.constant 0 : i32
    return %arg0, %c0_i32 : i32, i32
  }
}

</mosaic_0001>

<llo_original>
// kernel: tpu_custom_call.1
$region0: #{tpu_custom_call.1}
  #allocation0 [shape = 'u32[]', space=smem, size = 0x4, offset = 0x4, fixed_abs, tag = 'smem constant byte address 0x4 - core index']
  #allocation1 [shape = 'u32[144,128]{1,0:T(1,128)}', space=vmem, size = 0x12000, scoped, tag = 'internal scratch']
  %s0 = inlined_call_operand.vmem [shape: f32[1024,8], index: 0, kind: input, shape index: {}]
  %s1 = inlined_call_operand.vmem [shape: f32[8,1024], index: 1, kind: input, shape index: {}]
  %s2 = inlined_call_operand.vmem [shape: f32[1,1024], index: 2, kind: input, shape index: {}]
  %s3 = inlined_call_operand.vmem [shape: f32[1,1024], index: 3, kind: input, shape index: {}]
  %s4 = inlined_call_operand.vmem [shape: f32[1024,1], index: 4, kind: output, shape index: {}]
  %s5 = sld [smem:[#allocation0]]
  $region49: #{tpu_custom_call.1} parent=0
    _
  %s7 = ssub.s32 1, %s5
  %s8 = scalar_select 0, %s7, %s5
  loop: start=0, step=1, limit=10
  $region2: #{tpu_custom_call.1} parent=0 // loop_pre_header
    _
  $region3: #{tpu_custom_call.1} parent=0 // loop_header
    %s10 = sphi 0, %s14
    %p11 = scmp.ge.s32.totalorder %s10, 10
    %s20 = sphi 0, %s22
    %s23 = sphi 0, %s20
    %s24 = sphi 0, %s23
    %s40 = sphi 0, %s24
    %s44 = sphi 0, %s44
    %s46 = sphi 0, %s44
    %s47 = sphi 0, %s46
    %s61 = sphi 0, %s47
    %s65 = sphi 0, %s65
    %s67 = sphi 0, %s65
    %s68 = sphi 0, %s67
    %s82 = sphi 0, %s68
    %s86 = sphi 0, %s86
    %s88 = sphi 0, %s86
    %s89 = sphi 0, %s88
    %s103 = sphi 0, %s89
    %s109 = sphi 0, %s111
    %s112 = sphi 0, %s109
    %s113 = sphi 0, %s112
    %s129 = sphi 0, %s113
  $region4: #{tpu_custom_call.1} parent=0 // loop_header_branch
    %13 = sbr.rel (%p11) target = $region8
  $region5: #{tpu_custom_call.1} parent=0 // loop_body
    %s15 = ssub.s32 %s10, 1
    %s16 = ssub.s32 %s10, 2
    %s17 = sadd.s32 %s10, 1
    %s18 = ssub.s32 %s10, %s17
    %p19 = scmp.eq.s32.totalorder %s18, 0
    %s21 = sadd.s32 %s20, 1
    %s22 = scalar_select %p19, %s20, %s21
    %p25 = pneg %p19
    %p26 = scmp.eq.s32.totalorder %s10, 7
    %p27 = por %p25, %p26
    %p28 = scmp.ne.s32.totalorder %s20, %s23
    %p29 = scmp.eq.s32.totalorder %s10, 0
    %p30 = por %p28, %p29
    %p31 = scmp.ne.s32.totalorder %s20, %s23
    %p32 = scmp.eq.s32.totalorder %s15, 7
    %p33 = por %p31, %p32
    %p34 = scmp.ne.s32.totalorder %s23, %s24
    %p35 = scmp.eq.s32.totalorder %s15, 0
    %p36 = por %p34, %p35
    %p37 = scmp.ne.s32.totalorder %s23, %s24
    %p38 = scmp.eq.s32.totalorder %s16, 7
    %p39 = por %p37, %p38
    %p41 = scmp.ne.s32.totalorder %s24, %s40
    %p42 = scmp.eq.s32.totalorder %s16, 0
    %p43 = por %p41, %p42
    %s45 = sadd.s32 %s44, 1
    %p48 = scmp.eq.s32.totalorder %s10, 7
    %p49 = scmp.ne.s32.totalorder %s44, %s46
    %p50 = scmp.eq.s32.totalorder %s10, 0
    %p51 = por %p49, %p50
    %p52 = scmp.ne.s32.totalorder %s44, %s46
    %p53 = scmp.eq.s32.totalorder %s15, 7
    %p54 = por %p52, %p53
    %p55 = scmp.ne.s32.totalorder %s46, %s47
    %p56 = scmp.eq.s32.totalorder %s15, 0
    %p57 = por %p55, %p56
    %p58 = scmp.ne.s32.totalorder %s46, %s47
    %p59 = scmp.eq.s32.totalorder %s16, 7
    %p60 = por %p58, %p59
    %p62 = scmp.ne.s32.totalorder %s47, %s61
    %p63 = scmp.eq.s32.totalorder %s16, 0
    %p64 = por %p62, %p63
    %s66 = sadd.s32 %s65, 1
    %p69 = scmp.eq.s32.totalorder %s10, 7
    %p70 = scmp.ne.s32.totalorder %s65, %s67
    %p71 = scmp.eq.s32.totalorder %s10, 0
    %p72 = por %p70, %p71
    %p73 = scmp.ne.s32.totalorder %s65, %s67
    %p74 = scmp.eq.s32.totalorder %s15, 7
    %p75 = por %p73, %p74
    %p76 = scmp.ne.s32.totalorder %s67, %s68
    %p77 = scmp.eq.s32.totalorder %s15, 0
    %p78 = por %p76, %p77
    %p79 = scmp.ne.s32.totalorder %s67, %s68
    %p80 = scmp.eq.s32.totalorder %s16, 7
    %p81 = por %p79, %p80
    %p83 = scmp.ne.s32.totalorder %s68, %s82
    %p84 = scmp.eq.s32.totalorder %s16, 0
    %p85 = por %p83, %p84
    %s87 = sadd.s32 %s86, 1
    %p90 = scmp.eq.s32.totalorder %s10, 7
    %p91 = scmp.ne.s32.totalorder %s86, %s88
    %p92 = scmp.eq.s32.totalorder %s10, 0
    %p93 = por %p91, %p92
    %p94 = scmp.ne.s32.totalorder %s86, %s88
    %p95 = scmp.eq.s32.totalorder %s15, 7
    %p96 = por %p94, %p95
    %p97 = scmp.ne.s32.totalorder %s88, %s89
    %p98 = scmp.eq.s32.totalorder %s15, 0
    %p99 = por %p97, %p98
    %p100 = scmp.ne.s32.totalorder %s88, %s89
    %p101 = scmp.eq.s32.totalorder %s16, 7
    %p102 = por %p100, %p101
    %p104 = scmp.ne.s32.totalorder %s89, %s103
    %p105 = scmp.eq.s32.totalorder %s16, 0
    %p106 = por %p104, %p105
    %s107 = ssub.s32 %s10, %s17
    %p108 = scmp.eq.s32.totalorder %s107, 0
    %s110 = sadd.s32 %s109, 1
    %s111 = scalar_select %p108, %s109, %s110
    %p114 = pneg %p108
    %p115 = scmp.eq.s32.totalorder %s10, 7
    %p116 = por %p114, %p115
    %p117 = scmp.ne.s32.totalorder %s109, %s112
    %p118 = scmp.eq.s32.totalorder %s10, 0
    %p119 = por %p117, %p118
    %p120 = scmp.ne.s32.totalorder %s109, %s112
    %p121 = scmp.eq.s32.totalorder %s15, 7
    %p122 = por %p120, %p121
    %p123 = scmp.ne.s32.totalorder %s112, %s113
    %p124 = scmp.eq.s32.totalorder %s15, 0
    %p125 = por %p123, %p124
    %p126 = scmp.ne.s32.totalorder %s112, %s113
    %p127 = scmp.eq.s32.totalorder %s16, 7
    %p128 = por %p126, %p127
    %p130 = scmp.ne.s32.totalorder %s113, %s129
    %p131 = scmp.eq.s32.totalorder %s16, 0
    %p132 = por %p130, %p131
    %p133 = scmp.le.s32.totalorder 1, %s10
    %p134 = scmp.lt.s32.totalorder %s10, 9
    %p135 = pnand %p133, %p134
    %p136 = pneg %p135
    // Predicated region
    $region9: #{tpu_custom_call.1} parent=5 // pred_check
      _
    $region10: #{tpu_custom_call.1} parent=5 // pred_check_branch
      %138 = sbr.rel (%p135) target = $region12
    $region11: #{tpu_custom_call.1} parent=5 // pred_region
      %s139 = ssub.s32 %s10, 1
      // Predicated region
      $region13: #{tpu_custom_call.1} parent=11 // pred_check
        %p140 = pneg %p57
      $region14: #{tpu_custom_call.1} parent=11 // pred_check_branch
        %142 = sbr.rel (%p140) target = $region16
      $region15: #{tpu_custom_call.1} parent=11 // pred_region
        _
      $region16: #{tpu_custom_call.1} parent=11 // pred_fallthru
        _
      // Predicated region
      $region17: #{tpu_custom_call.1} parent=11 // pred_check
        %p143 = pneg %p78
      $region18: #{tpu_custom_call.1} parent=11 // pred_check_branch
        %145 = sbr.rel (%p143) target = $region20
      $region19: #{tpu_custom_call.1} parent=11 // pred_region
        _
      $region20: #{tpu_custom_call.1} parent=11 // pred_fallthru
        _
      // Predicated region
      $region21: #{tpu_custom_call.1} parent=11 // pred_check
        %p146 = pneg %p99
      $region22: #{tpu_custom_call.1} parent=11 // pred_check_branch
        %148 = sbr.rel (%p146) target = $region24
      $region23: #{tpu_custom_call.1} parent=11 // pred_region
        _
      $region24: #{tpu_custom_call.1} parent=11 // pred_fallthru
        _
    $region12: #{tpu_custom_call.1} parent=5 // pred_fallthru
      _
    %p149 = scmp.lt.s32.totalorder %s10, 8
    // Predicated region
    $region25: #{tpu_custom_call.1} parent=5 // pred_check
      %p150 = pneg %p149
    $region26: #{tpu_custom_call.1} parent=5 // pred_check_branch
      %152 = sbr.rel (%p150) target = $region28
    $region27: #{tpu_custom_call.1} parent=5 // pred_region
      // Predicated region
      $region29: #{tpu_custom_call.1} parent=27 // pred_check
        %p153 = pneg %p30
      $region30: #{tpu_custom_call.1} parent=27 // pred_check_branch
        %155 = sbr.rel (%p153) target = $region32
      $region31: #{tpu_custom_call.1} parent=27 // pred_region
        %s156 = smul.u32 16, %s10
        %p157 = scmp.lt.s32.totalorder %s156, 127
        %s158 = scalar_select %p157, %s156, 127
        %s159 = smul.addr %s158, 8
        %s160 = scalar_lea.vmem %s0, %s159
        %s161 = smul.u32 16, %s10
      $region32: #{tpu_custom_call.1} parent=27 // pred_fallthru
        _
    $region28: #{tpu_custom_call.1} parent=5 // pred_fallthru
      _
    %p162 = scmp.le.s32.totalorder 1, %s10
    %p163 = scmp.lt.s32.totalorder %s10, 9
    %p164 = pnand %p162, %p163
    %p165 = pneg %p164
    // Predicated region
    $region33: #{tpu_custom_call.1} parent=5 // pred_check
      _
    $region34: #{tpu_custom_call.1} parent=5 // pred_check_branch
      %167 = sbr.rel (%p164) target = $region36
    $region35: #{tpu_custom_call.1} parent=5 // pred_region
      %s168 = ssub.s32 %s10, 1
      %s169 = smul.u32 16, %s15
      %p170 = scmp.lt.s32.totalorder %s169, 127
      %s171 = scalar_select %p170, %s169, 127
      %s172 = smul.addr %s171, 8
      %s173 = scalar_lea.vmem %s0, %s172
      %p174 = pneg %p36
      %p175 = pneg %p33
      %p176 = pneg %p57
      %p177 = pneg %p54
      %p178 = pneg %p78
      %p179 = pneg %p75
      %p180 = pneg %p99
      %p181 = pneg %p96
      %p182 = pneg %p125
      %p183 = pneg %p122
      %s184 = smul.u32 16, %s15
      %p185 = scmp.lt.s32.totalorder %s184, 127
      %s186 = scalar_select %p185, %s184, 127
      %s187 = smul.addr %s186, 8
      %s188 = scalar_lea.vmem %s4, %s187
      %s189 = smul.u32 16, %s15
      %p190 = scmp.lt.s32.totalorder %s189, 127
      %s191 = scalar_select %p190, %s189, 127
      %s192 = smul.addr %s191, 8
      %s193 = scalar_lea.vmem %s0, %s192
      %s194 = smul.u32 16, %s15
      %s195 = smul.u32 16, %s15
      %p196 = scmp.lt.s32.totalorder %s195, 127
      %s197 = scalar_select %p196, %s195, 127
      %s198 = smul.addr %s197, 8
      %s199 = scalar_lea.vmem %s4, %s198
      %s200 = smul.u32 16, %s15
      %v201 = vld [vmem:[%s193] sm:$0xff]
      %v202 = vld [vmem:[%s193 + $0x8] sm:$0xff]
      %v203 = vld [vmem:[%s193 + $0x10] sm:$0xff]
      %v204 = vld [vmem:[%s193 + $0x18] sm:$0xff]
      %v205 = vld [vmem:[%s193 + $0x20] sm:$0xff]
      %v206 = vld [vmem:[%s193 + $0x28] sm:$0xff]
      %v207 = vld [vmem:[%s193 + $0x30] sm:$0xff]
      %v208 = vld [vmem:[%s193 + $0x38] sm:$0xff]
      %v209 = vld [vmem:[%s193 + $0x40] sm:$0xff]
      %v210 = vld [vmem:[%s193 + $0x48] sm:$0xff]
      %v211 = vld [vmem:[%s193 + $0x50] sm:$0xff]
      %v212 = vld [vmem:[%s193 + $0x58] sm:$0xff]
      %v213 = vld [vmem:[%s193 + $0x60] sm:$0xff]
      %v214 = vld [vmem:[%s193 + $0x68] sm:$0xff]
      %v215 = vld [vmem:[%s193 + $0x70] sm:$0xff]
      %v216 = vld [vmem:[%s193 + $0x78] sm:$0xff]
      %v217 = vld [vmem:[%s1] sm:$0xff]
      %v218 = vld [vmem:[%s1 + $0x8] sm:$0xff]
      %v219 = vld [vmem:[%s1 + $0x10] sm:$0xff]
      %v220 = vld [vmem:[%s1 + $0x18] sm:$0xff]
      %v221 = vld [vmem:[%s1 + $0x20] sm:$0xff]
      %v222 = vld [vmem:[%s1 + $0x28] sm:$0xff]
      %v223 = vld [vmem:[%s1 + $0x30] sm:$0xff]
      %v224 = vld [vmem:[%s1 + $0x38] sm:$0xff]
      %vm225 = vcmask 64512
      %v227 = vsel %vm225, %v201, 0
      %v230 = vsel %vm225, %v202, 0
      %v233 = vsel %vm225, %v203, 0
      %v236 = vsel %vm225, %v204, 0
      %v239 = vsel %vm225, %v205, 0
      %v242 = vsel %vm225, %v206, 0
      %v245 = vsel %vm225, %v207, 0
      %v248 = vsel %vm225, %v208, 0
      %v251 = vsel %vm225, %v209, 0
      %v254 = vsel %vm225, %v210, 0
      %v257 = vsel %vm225, %v211, 0
      %v260 = vsel %vm225, %v212, 0
      %v263 = vsel %vm225, %v213, 0
      %v266 = vsel %vm225, %v214, 0
      %v269 = vsel %vm225, %v215, 0
      %v272 = vsel %vm225, %v216, 0
      %274 = vmatprep.subr.mxu0 %v218
      %275 = vmatpush1.msra.mxu0 %v217
      %276 = vmatprep.subr.mxu0 0.0
      %277 = vmatpush1.msra.mxu0 0.0
      %278 = vmatprep.subr.mxu0 0.0
      %279 = vmatpush1.msra.mxu0 0.0
      %280 = vmatprep.subr.mxu0 0.0
      %281 = vmatpush1.msra.mxu0 0.0
      %282 = vmatprep.subr.mxu0 0.0
      %283 = vmatpush1.msra.mxu0 0.0
      %284 = vmatprep.subr.mxu0 0.0
      %285 = vmatpush1.msra.mxu0 0.0
      %286 = vmatprep.subr.mxu0 0.0
      %287 = vmatpush1.msra.mxu0 0.0
      %288 = vmatprep.subr.mxu0 0.0
      %289 = vmatpush1.msra.mxu0 0.0
      %290 = vmatprep.subr.mxu0 0.0
      %291 = vmatpush1.msra.mxu0 0.0
      %292 = vmatprep.subr.mxu0 0.0
      %293 = vmatpush1.msra.mxu0 0.0
      %294 = vmatprep.subr.mxu0 0.0
      %295 = vmatpush1.msra.mxu0 0.0
      %296 = vmatprep.subr.mxu0 0.0
      %297 = vmatpush1.msra.mxu0 0.0
      %298 = vmatprep.subr.mxu0 0.0
      %299 = vmatpush1.msra.mxu0 0.0
      %300 = vmatprep.subr.mxu0 0.0
      %301 = vmatpush1.msra.mxu0 0.0
      %302 = vmatprep.subr.mxu0 0.0
      %303 = vmatpush1.msra.mxu0 0.0
      %304 = vmatprep.subr.mxu0 0.0
      %305 = vmatpush1.msra.mxu0 0.0
      %306 = vmatprep.subr.mxu0 0.0
      %307 = vmatpush1.msra.mxu0 0.0
      %308 = vmatprep.subr.mxu0 0.0
      %309 = vmatpush1.msra.mxu0 0.0
      %310 = vmatprep.subr.mxu0 0.0
      %311 = vmatpush1.msra.mxu0 0.0
      %312 = vmatprep.subr.mxu0 0.0
      %313 = vmatpush1.msra.mxu0 0.0
      %314 = vmatprep.subr.mxu0 0.0
      %315 = vmatpush1.msra.mxu0 0.0
      %316 = vmatprep.subr.mxu0 0.0
      %317 = vmatpush1.msra.mxu0 0.0
      %318 = vmatprep.subr.mxu0 0.0
      %319 = vmatpush1.msra.mxu0 0.0
      %320 = vmatprep.subr.mxu0 0.0
      %321 = vmatpush1.msra.mxu0 0.0
      %322 = vmatprep.subr.mxu0 0.0
      %323 = vmatpush1.msra.mxu0 0.0
      %324 = vmatprep.subr.mxu0 0.0
      %325 = vmatpush1.msra.mxu0 0.0
      %326 = vmatprep.subr.mxu0 0.0
      %327 = vmatpush1.msra.mxu0 0.0
      %328 = vmatprep.subr.mxu0 0.0
      %329 = vmatpush1.msra.mxu0 0.0
      %330 = vmatprep.subr.mxu0 0.0
      %331 = vmatpush1.msra.mxu0 0.0
      %332 = vmatprep.subr.mxu0 0.0
      %333 = vmatpush1.msra.mxu0 0.0
      %334 = vmatprep.subr.mxu0 0.0
      %335 = vmatpush1.msra.mxu0 0.0
      %336 = vmatprep.subr.mxu0 0.0
      %337 = vmatpush1.msra.mxu0 0.0
      %338 = vmatprep.mubr.f32.mxu0 0.0
      %339 = vmatmul.mubr.f32.gmra.mrb[0].mxu0 %v227
      %v340 = vpop.f32.mrb[0].mxu0
      %v341 = vadd.f32 0.0, %v340
      %v342 = vpop.f32.mrb[0].mxu0
      %v343 = vadd.f32 0.0, %v342
      %344 = vmatprep.mubr.f32.mxu0 0.0
      %345 = vmatmul.mubr.f32.gmra.mrb[0].mxu0 %v230
      %v346 = vpop.f32.mrb[0].mxu0
      %v347 = vadd.f32 0.0, %v346
      %v348 = vpop.f32.mrb[0].mxu0
      %v349 = vadd.f32 0.0, %v348
      %350 = vmatprep.mubr.f32.mxu0 0.0
      %351 = vmatmul.mubr.f32.gmra.mrb[0].mxu0 %v233
      %v352 = vpop.f32.mrb[0].mxu0
      %v353 = vadd.f32 0.0, %v352
      %v354 = vpop.f32.mrb[0].mxu0
      %v355 = vadd.f32 0.0, %v354
      %356 = vmatprep.mubr.f32.mxu0 0.0
      %357 = vmatmul.mubr.f32.gmra.mrb[0].mxu0 %v236
      %v358 = vpop.f32.mrb[0].mxu0
      %v359 = vadd.f32 0.0, %v358
      %v360 = vpop.f32.mrb[0].mxu0
      %v361 = vadd.f32 0.0, %v360
      %362 = vmatprep.mubr.f32.mxu0 0.0
      %363 = vmatmul.mubr.f32.gmra.mrb[0].mxu0 %v239
      %v364 = vpop.f32.mrb[0].mxu0
      %v365 = vadd.f32 0.0, %v364
      %v366 = vpop.f32.mrb[0].mxu0
      %v367 = vadd.f32 0.0, %v366
      %368 = vmatprep.mubr.f32.mxu0 0.0
      %369 = vmatmul.mubr.f32.gmra.mrb[0].mxu0 %v242
      %v370 = vpop.f32.mrb[0].mxu0
      %v371 = vadd.f32 0.0, %v370
      %v372 = vpop.f32.mrb[0].mxu0
      %v373 = vadd.f32 0.0, %v372
      %374 = vmatprep.mubr.f32.mxu0 0.0
      %375 = vmatmul.mubr.f32.gmra.mrb[0].mxu0 %v245
      %v376 = vpop.f32.mrb[0].mxu0
      %v377 = vadd.f32 0.0, %v376
      %v378 = vpop.f32.mrb[0].mxu0
      %v379 = vadd.f32 0.0, %v378
      %380 = vmatprep.mubr.f32.mxu0 0.0
      %381 = vmatmul.mubr.f32.gmra.mrb[0].mxu0 %v248
      %v382 = vpop.f32.mrb[0].mxu0
      %v383 = vadd.f32 0.0, %v382
      %v384 = vpop.f32.mrb[0].mxu0
      %v385 = vadd.f32 0.0, %v384
      %386 = vmatprep.mubr.f32.mxu0 0.0
      %387 = vmatmul.mubr.f32.gmra.mrb[0].mxu0 %v251
      %v388 = vpop.f32.mrb[0].mxu0
      %v389 = vadd.f32 0.0, %v388
      %v390 = vpop.f32.mrb[0].mxu0
      %v391 = vadd.f32 0.0, %v390
      %392 = vmatprep.mubr.f32.mxu0 0.0
      %393 = vmatmul.mubr.f32.gmra.mrb[0].mxu0 %v254
      %v394 = vpop.f32.mrb[0].mxu0
      %v395 = vadd.f32 0.0, %v394
      %v396 = vpop.f32.mrb[0].mxu0
      %v397 = vadd.f32 0.0, %v396
      %398 = vmatprep.mubr.f32.mxu0 0.0
      %399 = vmatmul.mubr.f32.gmra.mrb[0].mxu0 %v257
      %v400 = vpop.f32.mrb[0].mxu0
      %v401 = vadd.f32 0.0, %v400
      %v402 = vpop.f32.mrb[0].mxu0
      %v403 = vadd.f32 0.0, %v402
      %404 = vmatprep.mubr.f32.mxu0 0.0
      %405 = vmatmul.mubr.f32.gmra.mrb[0].mxu0 %v260
      %v406 = vpop.f32.mrb[0].mxu0
      %v407 = vadd.f32 0.0, %v406
      %v408 = vpop.f32.mrb[0].mxu0
      %v409 = vadd.f32 0.0, %v408
      %410 = vmatprep.mubr.f32.mxu0 0.0
      %411 = vmatmul.mubr.f32.gmra.mrb[0].mxu0 %v263
      %v412 = vpop.f32.mrb[0].mxu0
      %v413 = vadd.f32 0.0, %v412
      %v414 = vpop.f32.mrb[0].mxu0
      %v415 = vadd.f32 0.0, %v414
      %416 = vmatprep.mubr.f32.mxu0 0.0
      %417 = vmatmul.mubr.f32.gmra.mrb[0].mxu0 %v266
      %v418 = vpop.f32.mrb[0].mxu0
      %v419 = vadd.f32 0.0, %v418
      %v420 = vpop.f32.mrb[0].mxu0
      %v421 = vadd.f32 0.0, %v420
      %422 = vmatprep.mubr.f32.mxu0 0.0
      %423 = vmatmul.mubr.f32.gmra.mrb[0].mxu0 %v269
      %v424 = vpop.f32.mrb[0].mxu0
      %v425 = vadd.f32 0.0, %v424
      %v426 = vpop.f32.mrb[0].mxu0
      %v427 = vadd.f32 0.0, %v426
      %428 = vmatprep.mubr.f32.mxu0 0.0
      %429 = vmatmul.mubr.f32.gmra.mrb[0].mxu0 %v272
      %v430 = vpop.f32.mrb[0].mxu0
      %v431 = vadd.f32 0.0, %v430
      %v432 = vpop.f32.mrb[0].mxu0
      %v433 = vadd.f32 0.0, %v432
      %434 = vdwg.mxu0
      %435 = vmatprep.subr.mxu0 %v220
      %436 = vmatpush1.msra.mxu0 %v219
      %437 = vmatprep.subr.mxu0 0.0
      %438 = vmatpush1.msra.mxu0 0.0
      %439 = vmatprep.subr.mxu0 0.0
      %440 = vmatpush1.msra.mxu0 0.0
      %441 = vmatprep.subr.mxu0 0.0
      %442 = vmatpush1.msra.mxu0 0.0
      %443 = vmatprep.subr.mxu0 0.0
      %444 = vmatpush1.msra.mxu0 0.0
      %445 = vmatprep.subr.mxu0 0.0
      %446 = vmatpush1.msra.mxu0 0.0
      %447 = vmatprep.subr.mxu0 0.0
      %448 = vmatpush1.msra.mxu0 0.0
      %449 = vmatprep.subr.mxu0 0.0
      %450 = vmatpush1.msra.mxu0 0.0
      %451 = vmatprep.subr.mxu0 0.0
      %452 = vmatpush1.msra.mxu0 0.0
      %453 = vmatprep.subr.mxu0 0.0
      %454 = vmatpush1.msra.mxu0 0.0
      %455 = vmatprep.subr.mxu0 0.0
      %456 = vmatpush1.msra.mxu0 0.0
      %457 = vmatprep.subr.mxu0 0.0
      %458 = vmatpush1.msra.mxu0 0.0
      %459 = vmatprep.subr.mxu0 0.0
      %460 = vmatpush1.msra.mxu0 0.0
      %461 = vmatprep.subr.mxu0 0.0
      %462 = vmatpush1.msra.mxu0 0.0
      %463 = vmatprep.subr.mxu0 0.0
      %464 = vmatpush1.msra.mxu0 0.0
      %465 = vmatprep.subr.mxu0 0.0
      %466 = vmatpush1.msra.mxu0 0.0
      %467 = vmatprep.subr.mxu0 0.0
      %468 = vmatpush1.msra.mxu0 0.0
      %469 = vmatprep.subr.mxu0 0.0
      %470 = vmatpush1.msra.mxu0 0.0
      %471 = vmatprep.subr.mxu0 0.0
      %472 = vmatpush1.msra.mxu0 0.0
      %473 = vmatprep.subr.mxu0 0.0
      %474 = vmatpush1.msra.mxu0 0.0
      %475 = vmatprep.subr.mxu0 0.0
      %476 = vmatpush1.msra.mxu0 0.0
      %477 = vmatprep.subr.mxu0 0.0
      %478 = vmatpush1.msra.mxu0 0.0
      %479 = vmatprep.subr.mxu0 0.0
      %480 = vmatpush1.msra.mxu0 0.0
      %481 = vmatprep.subr.mxu0 0.0
      %482 = vmatpush1.msra.mxu0 0.0
      %483 = vmatprep.subr.mxu0 0.0
      %484 = vmatpush1.msra.mxu0 0.0
      %485 = vmatprep.subr.mxu0 0.0
      %486 = vmatpush1.msra.mxu0 0.0
      %487 = vmatprep.subr.mxu0 0.0
      %488 = vmatpush1.msra.mxu0 0.0
      %489 = vmatprep.subr.mxu0 0.0
      %490 = vmatpush1.msra.mxu0 0.0
      %491 = vmatprep.subr.mxu0 0.0
      %492 = vmatpush1.msra.mxu0 0.0
      %493 = vmatprep.subr.mxu0 0.0
      %494 = vmatpush1.msra.mxu0 0.0
      %495 = vmatprep.subr.mxu0 0.0
      %496 = vmatpush1.msra.mxu0 0.0
      %497 = vmatprep.subr.mxu0 0.0
      %498 = vmatpush1.msra.mxu0 0.0
      %499 = vmatprep.mubr.f32.mxu0 0.0
      %500 = vmatmul.mubr.f32.gmra.mrb[0].mxu0 %v227
      %v501 = vpop.f32.mrb[0].mxu0
      %v502 = vadd.f32 0.0, %v501
      %v503 = vpop.f32.mrb[0].mxu0
      %v504 = vadd.f32 0.0, %v503
      %505 = vmatprep.mubr.f32.mxu0 0.0
      %506 = vmatmul.mubr.f32.gmra.mrb[0].mxu0 %v230
      %v507 = vpop.f32.mrb[0].mxu0
      %v508 = vadd.f32 0.0, %v507
      %v509 = vpop.f32.mrb[0].mxu0
      %v510 = vadd.f32 0.0, %v509
      %511 = vmatprep.mubr.f32.mxu0 0.0
      %512 = vmatmul.mubr.f32.gmra.mrb[0].mxu0 %v233
      %v513 = vpop.f32.mrb[0].mxu0
      %v514 = vadd.f32 0.0, %v513
      %v515 = vpop.f32.mrb[0].mxu0
      %v516 = vadd.f32 0.0, %v515
      %517 = vmatprep.mubr.f32.mxu0 0.0
      %518 = vmatmul.mubr.f32.gmra.mrb[0].mxu0 %v236
      %v519 = vpop.f32.mrb[0].mxu0
      %v520 = vadd.f32 0.0, %v519
      %v521 = vpop.f32.mrb[0].mxu0
      %v522 = vadd.f32 0.0, %v521
      %523 = vmatprep.mubr.f32.mxu0 0.0
      %524 = vmatmul.mubr.f32.gmra.mrb[0].mxu0 %v239
      %v525 = vpop.f32.mrb[0].mxu0
      %v526 = vadd.f32 0.0, %v525
      %v527 = vpop.f32.mrb[0].mxu0
      %v528 = vadd.f32 0.0, %v527
      %529 = vmatprep.mubr.f32.mxu0 0.0
      %530 = vmatmul.mubr.f32.gmra.mrb[0].mxu0 %v242
      %v531 = vpop.f32.mrb[0].mxu0
      %v532 = vadd.f32 0.0, %v531
      %v533 = vpop.f32.mrb[0].mxu0
      %v534 = vadd.f32 0.0, %v533
      %535 = vmatprep.mubr.f32.mxu0 0.0
      %536 = vmatmul.mubr.f32.gmra.mrb[0].mxu0 %v245
      %v537 = vpop.f32.mrb[0].mxu0
      %v538 = vadd.f32 0.0, %v537
      %v539 = vpop.f32.mrb[0].mxu0
      %v540 = vadd.f32 0.0, %v539
      %541 = vmatprep.mubr.f32.mxu0 0.0
      %542 = vmatmul.mubr.f32.gmra.mrb[0].mxu0 %v248
      %v543 = vpop.f32.mrb[0].mxu0
      %v544 = vadd.f32 0.0, %v543
      %v545 = vpop.f32.mrb[0].mxu0
      %v546 = vadd.f32 0.0, %v545
      %547 = vmatprep.mubr.f32.mxu0 0.0
      %548 = vmatmul.mubr.f32.gmra.mrb[0].mxu0 %v251
      %v549 = vpop.f32.mrb[0].mxu0
      %v550 = vadd.f32 0.0, %v549
      %v551 = vpop.f32.mrb[0].mxu0
      %v552 = vadd.f32 0.0, %v551
      %553 = vmatprep.mubr.f32.mxu0 0.0
      %554 = vmatmul.mubr.f32.gmra.mrb[0].mxu0 %v254
      %v555 = vpop.f32.mrb[0].mxu0
      %v556 = vadd.f32 0.0, %v555
      %v557 = vpop.f32.mrb[0].mxu0
      %v558 = vadd.f32 0.0, %v557
      %559 = vmatprep.mubr.f32.mxu0 0.0
      %560 = vmatmul.mubr.f32.gmra.mrb[0].mxu0 %v257
      %v561 = vpop.f32.mrb[0].mxu0
      %v562 = vadd.f32 0.0, %v561
      %v563 = vpop.f32.mrb[0].mxu0
      %v564 = vadd.f32 0.0, %v563
      %565 = vmatprep.mubr.f32.mxu0 0.0
      %566 = vmatmul.mubr.f32.gmra.mrb[0].mxu0 %v260
      %v567 = vpop.f32.mrb[0].mxu0
      %v568 = vadd.f32 0.0, %v567
      %v569 = vpop.f32.mrb[0].mxu0
      %v570 = vadd.f32 0.0, %v569
      %571 = vmatprep.mubr.f32.mxu0 0.0
      %572 = vmatmul.mubr.f32.gmra.mrb[0].mxu0 %v263
      %v573 = vpop.f32.mrb[0].mxu0
      %v574 = vadd.f32 0.0, %v573
      %v575 = vpop.f32.mrb[0].mxu0
      %v576 = vadd.f32 0.0, %v575
      %577 = vmatprep.mubr.f32.mxu0 0.0
      %578 = vmatmul.mubr.f32.gmra.mrb[0].mxu0 %v266
      %v579 = vpop.f32.mrb[0].mxu0
      %v580 = vadd.f32 0.0, %v579
      %v581 = vpop.f32.mrb[0].mxu0
      %v582 = vadd.f32 0.0, %v581
      %583 = vmatprep.mubr.f32.mxu0 0.0
      %584 = vmatmul.mubr.f32.gmra.mrb[0].mxu0 %v269
      %v585 = vpop.f32.mrb[0].mxu0
      %v586 = vadd.f32 0.0, %v585
      %v587 = vpop.f32.mrb[0].mxu0
      %v588 = vadd.f32 0.0, %v587
      %589 = vmatprep.mubr.f32.mxu0 0.0
      %590 = vmatmul.mubr.f32.gmra.mrb[0].mxu0 %v272
      %v591 = vpop.f32.mrb[0].mxu0
      %v592 = vadd.f32 0.0, %v591
      %v593 = vpop.f32.mrb[0].mxu0
      %v594 = vadd.f32 0.0, %v593
      %595 = vdwg.mxu0
      %596 = vmatprep.subr.mxu0 %v222
      %597 = vmatpush1.msra.mxu0 %v221
      %598 = vmatprep.subr.mxu0 0.0
      %599 = vmatpush1.msra.mxu0 0.0
      %600 = vmatprep.subr.mxu0 0.0
      %601 = vmatpush1.msra.mxu0 0.0
      %602 = vmatprep.subr.mxu0 0.0
      %603 = vmatpush1.msra.mxu0 0.0
      %604 = vmatprep.subr.mxu0 0.0
      %605 = vmatpush1.msra.mxu0 0.0
      %606 = vmatprep.subr.mxu0 0.0
      %607 = vmatpush1.msra.mxu0 0.0
      %608 = vmatprep.subr.mxu0 0.0
      %609 = vmatpush1.msra.mxu0 0.0
      %610 = vmatprep.subr.mxu0 0.0
      %611 = vmatpush1.msra.mxu0 0.0
      %612 = vmatprep.subr.mxu0 0.0
      %613 = vmatpush1.msra.mxu0 0.0
      %614 = vmatprep.subr.mxu0 0.0
      %615 = vmatpush1.msra.mxu0 0.0
      %616 = vmatprep.subr.mxu0 0.0
      %617 = vmatpush1.msra.mxu0 0.0
      %618 = vmatprep.subr.mxu0 0.0
      %619 = vmatpush1.msra.mxu0 0.0
      %620 = vmatprep.subr.mxu0 0.0
      %621 = vmatpush1.msra.mxu0 0.0
      %622 = vmatprep.subr.mxu0 0.0
      %623 = vmatpush1.msra.mxu0 0.0
      %624 = vmatprep.subr.mxu0 0.0
      %625 = vmatpush1.msra.mxu0 0.0
      %626 = vmatprep.subr.mxu0 0.0
      %627 = vmatpush1.msra.mxu0 0.0
      %628 = vmatprep.subr.mxu0 0.0
      %629 = vmatpush1.msra.mxu0 0.0
      %630 = vmatprep.subr.mxu0 0.0
      %631 = vmatpush1.msra.mxu0 0.0
      %632 = vmatprep.subr.mxu0 0.0
      %633 = vmatpush1.msra.mxu0 0.0
      %634 = vmatprep.subr.mxu0 0.0
      %635 = vmatpush1.msra.mxu0 0.0
      %636 = vmatprep.subr.mxu0 0.0
      %637 = vmatpush1.msra.mxu0 0.0
      %638 = vmatprep.subr.mxu0 0.0
      %639 = vmatpush1.msra.mxu0 0.0
      %640 = vmatprep.subr.mxu0 0.0
      %641 = vmatpush1.msra.mxu0 0.0
      %642 = vmatprep.subr.mxu0 0.0
      %643 = vmatpush1.msra.mxu0 0.0
      %644 = vmatprep.subr.mxu0 0.0
      %645 = vmatpush1.msra.mxu0 0.0
      %646 = vmatprep.subr.mxu0 0.0
      %647 = vmatpush1.msra.mxu0 0.0
      %648 = vmatprep.subr.mxu0 0.0
      %649 = vmatpush1.msra.mxu0 0.0
      %650 = vmatprep.subr.mxu0 0.0
      %651 = vmatpush1.msra.mxu0 0.0
      %652 = vmatprep.subr.mxu0 0.0
      %653 = vmatpush1.msra.mxu0 0.0
      %654 = vmatprep.subr.mxu0 0.0
      %655 = vmatpush1.msra.mxu0 0.0
      %656 = vmatprep.subr.mxu0 0.0
      %657 = vmatpush1.msra.mxu0 0.0
      %658 = vmatprep.subr.mxu0 0.0
      %659 = vmatpush1.msra.mxu0 0.0
      %660 = vmatprep.mubr.f32.mxu0 0.0
      %661 = vmatmul.mubr.f32.gmra.mrb[0].mxu0 %v227
      %v662 = vpop.f32.mrb[0].mxu0
      %v663 = vadd.f32 0.0, %v662
      %v664 = vpop.f32.mrb[0].mxu0
      %v665 = vadd.f32 0.0, %v664
      %666 = vmatprep.mubr.f32.mxu0 0.0
      %667 = vmatmul.mubr.f32.gmra.mrb[0].mxu0 %v230
      %v668 = vpop.f32.mrb[0].mxu0
      %v669 = vadd.f32 0.0, %v668
      %v670 = vpop.f32.mrb[0].mxu0
      %v671 = vadd.f32 0.0, %v670
      %672 = vmatprep.mubr.f32.mxu0 0.0
      %673 = vmatmul.mubr.f32.gmra.mrb[0].mxu0 %v233
      %v674 = vpop.f32.mrb[0].mxu0
      %v675 = vadd.f32 0.0, %v674
      %v676 = vpop.f32.mrb[0].mxu0
      %v677 = vadd.f32 0.0, %v676
      %678 = vmatprep.mubr.f32.mxu0 0.0
      %679 = vmatmul.mubr.f32.gmra.mrb[0].mxu0 %v236
      %v680 = vpop.f32.mrb[0].mxu0
      %v681 = vadd.f32 0.0, %v680
      %v682 = vpop.f32.mrb[0].mxu0
      %v683 = vadd.f32 0.0, %v682
      %684 = vmatprep.mubr.f32.mxu0 0.0
      %685 = vmatmul.mubr.f32.gmra.mrb[0].mxu0 %v239
      %v686 = vpop.f32.mrb[0].mxu0
      %v687 = vadd.f32 0.0, %v686
      %v688 = vpop.f32.mrb[0].mxu0
      %v689 = vadd.f32 0.0, %v688
      %690 = vmatprep.mubr.f32.mxu0 0.0
      %691 = vmatmul.mubr.f32.gmra.mrb[0].mxu0 %v242
      %v692 = vpop.f32.mrb[0].mxu0
      %v693 = vadd.f32 0.0, %v692
      %v694 = vpop.f32.mrb[0].mxu0
      %v695 = vadd.f32 0.0, %v694
      %696 = vmatprep.mubr.f32.mxu0 0.0
      %697 = vmatmul.mubr.f32.gmra.mrb[0].mxu0 %v245
      %v698 = vpop.f32.mrb[0].mxu0
      %v699 = vadd.f32 0.0, %v698
      %v700 = vpop.f32.mrb[0].mxu0
      %v701 = vadd.f32 0.0, %v700
      %702 = vmatprep.mubr.f32.mxu0 0.0
      %703 = vmatmul.mubr.f32.gmra.mrb[0].mxu0 %v248
      %v704 = vpop.f32.mrb[0].mxu0
      %v705 = vadd.f32 0.0, %v704
      %v706 = vpop.f32.mrb[0].mxu0
      %v707 = vadd.f32 0.0, %v706
      %708 = vmatprep.mubr.f32.mxu0 0.0
      %709 = vmatmul.mubr.f32.gmra.mrb[0].mxu0 %v251
      %v710 = vpop.f32.mrb[0].mxu0
      %v711 = vadd.f32 0.0, %v710
      %v712 = vpop.f32.mrb[0].mxu0
      %v713 = vadd.f32 0.0, %v712
      %714 = vmatprep.mubr.f32.mxu0 0.0
      %715 = vmatmul.mubr.f32.gmra.mrb[0].mxu0 %v254
      %v716 = vpop.f32.mrb[0].mxu0
      %v717 = vadd.f32 0.0, %v716
      %v718 = vpop.f32.mrb[0].mxu0
      %v719 = vadd.f32 0.0, %v718
      %720 = vmatprep.mubr.f32.mxu0 0.0
      %721 = vmatmul.mubr.f32.gmra.mrb[0].mxu0 %v257
      %v722 = vpop.f32.mrb[0].mxu0
      %v723 = vadd.f32 0.0, %v722
      %v724 = vpop.f32.mrb[0].mxu0
      %v725 = vadd.f32 0.0, %v724
      %726 = vmatprep.mubr.f32.mxu0 0.0
      %727 = vmatmul.mubr.f32.gmra.mrb[0].mxu0 %v260
      %v728 = vpop.f32.mrb[0].mxu0
      %v729 = vadd.f32 0.0, %v728
      %v730 = vpop.f32.mrb[0].mxu0
      %v731 = vadd.f32 0.0, %v730
      %732 = vmatprep.mubr.f32.mxu0 0.0
      %733 = vmatmul.mubr.f32.gmra.mrb[0].mxu0 %v263
      %v734 = vpop.f32.mrb[0].mxu0
      %v735 = vadd.f32 0.0, %v734
      %v736 = vpop.f32.mrb[0].mxu0
      %v737 = vadd.f32 0.0, %v736
      %738 = vmatprep.mubr.f32.mxu0 0.0
      %739 = vmatmul.mubr.f32.gmra.mrb[0].mxu0 %v266
      %v740 = vpop.f32.mrb[0].mxu0
      %v741 = vadd.f32 0.0, %v740
      %v742 = vpop.f32.mrb[0].mxu0
      %v743 = vadd.f32 0.0, %v742
      %744 = vmatprep.mubr.f32.mxu0 0.0
      %745 = vmatmul.mubr.f32.gmra.mrb[0].mxu0 %v269
      %v746 = vpop.f32.mrb[0].mxu0
      %v747 = vadd.f32 0.0, %v746
      %v748 = vpop.f32.mrb[0].mxu0
      %v749 = vadd.f32 0.0, %v748
      %750 = vmatprep.mubr.f32.mxu0 0.0
      %751 = vmatmul.mubr.f32.gmra.mrb[0].mxu0 %v272
      %v752 = vpop.f32.mrb[0].mxu0
      %v753 = vadd.f32 0.0, %v752
      %v754 = vpop.f32.mrb[0].mxu0
      %v755 = vadd.f32 0.0, %v754
      %756 = vdwg.mxu0
      %757 = vmatprep.subr.mxu0 %v224
      %758 = vmatpush1.msra.mxu0 %v223
      %759 = vmatprep.subr.mxu0 0.0
      %760 = vmatpush1.msra.mxu0 0.0
      %761 = vmatprep.subr.mxu0 0.0
      %762 = vmatpush1.msra.mxu0 0.0
      %763 = vmatprep.subr.mxu0 0.0
      %764 = vmatpush1.msra.mxu0 0.0
      %765 = vmatprep.subr.mxu0 0.0
      %766 = vmatpush1.msra.mxu0 0.0
      %767 = vmatprep.subr.mxu0 0.0
      %768 = vmatpush1.msra.mxu0 0.0
      %769 = vmatprep.subr.mxu0 0.0
      %770 = vmatpush1.msra.mxu0 0.0
      %771 = vmatprep.subr.mxu0 0.0
      %772 = vmatpush1.msra.mxu0 0.0
      %773 = vmatprep.subr.mxu0 0.0
      %774 = vmatpush1.msra.mxu0 0.0
      %775 = vmatprep.subr.mxu0 0.0
      %776 = vmatpush1.msra.mxu0 0.0
      %777 = vmatprep.subr.mxu0 0.0
      %778 = vmatpush1.msra.mxu0 0.0
      %779 = vmatprep.subr.mxu0 0.0
      %780 = vmatpush1.msra.mxu0 0.0
      %781 = vmatprep.subr.mxu0 0.0
      %782 = vmatpush1.msra.mxu0 0.0
      %783 = vmatprep.subr.mxu0 0.0
      %784 = vmatpush1.msra.mxu0 0.0
      %785 = vmatprep.subr.mxu0 0.0
      %786 = vmatpush1.msra.mxu0 0.0
      %787 = vmatprep.subr.mxu0 0.0
      %788 = vmatpush1.msra.mxu0 0.0
      %789 = vmatprep.subr.mxu0 0.0
      %790 = vmatpush1.msra.mxu0 0.0
      %791 = vmatprep.subr.mxu0 0.0
      %792 = vmatpush1.msra.mxu0 0.0
      %793 = vmatprep.subr.mxu0 0.0
      %794 = vmatpush1.msra.mxu0 0.0
      %795 = vmatprep.subr.mxu0 0.0
      %796 = vmatpush1.msra.mxu0 0.0
      %797 = vmatprep.subr.mxu0 0.0
      %798 = vmatpush1.msra.mxu0 0.0
      %799 = vmatprep.subr.mxu0 0.0
      %800 = vmatpush1.msra.mxu0 0.0
      %801 = vmatprep.subr.mxu0 0.0
      %802 = vmatpush1.msra.mxu0 0.0
      %803 = vmatprep.subr.mxu0 0.0
      %804 = vmatpush1.msra.mxu0 0.0
      %805 = vmatprep.subr.mxu0 0.0
      %806 = vmatpush1.msra.mxu0 0.0
      %807 = vmatprep.subr.mxu0 0.0
      %808 = vmatpush1.msra.mxu0 0.0
      %809 = vmatprep.subr.mxu0 0.0
      %810 = vmatpush1.msra.mxu0 0.0
      %811 = vmatprep.subr.mxu0 0.0
      %812 = vmatpush1.msra.mxu0 0.0
      %813 = vmatprep.subr.mxu0 0.0
      %814 = vmatpush1.msra.mxu0 0.0
      %815 = vmatprep.subr.mxu0 0.0
      %816 = vmatpush1.msra.mxu0 0.0
      %817 = vmatprep.subr.mxu0 0.0
      %818 = vmatpush1.msra.mxu0 0.0
      %819 = vmatprep.subr.mxu0 0.0
      %820 = vmatpush1.msra.mxu0 0.0
      %821 = vmatprep.mubr.f32.mxu0 0.0
      %822 = vmatmul.mubr.f32.gmra.mrb[0].mxu0 %v227
      %v823 = vpop.f32.mrb[0].mxu0
      %v824 = vadd.f32 0.0, %v823
      %v825 = vpop.f32.mrb[0].mxu0
      %v826 = vadd.f32 0.0, %v825
      %827 = vmatprep.mubr.f32.mxu0 0.0
      %828 = vmatmul.mubr.f32.gmra.mrb[0].mxu0 %v230
      %v829 = vpop.f32.mrb[0].mxu0
      %v830 = vadd.f32 0.0, %v829
      %v831 = vpop.f32.mrb[0].mxu0
      %v832 = vadd.f32 0.0, %v831
      %833 = vmatprep.mubr.f32.mxu0 0.0
      %834 = vmatmul.mubr.f32.gmra.mrb[0].mxu0 %v233
      %v835 = vpop.f32.mrb[0].mxu0
      %v836 = vadd.f32 0.0, %v835
      %v837 = vpop.f32.mrb[0].mxu0
      %v838 = vadd.f32 0.0, %v837
      %839 = vmatprep.mubr.f32.mxu0 0.0
      %840 = vmatmul.mubr.f32.gmra.mrb[0].mxu0 %v236
      %v841 = vpop.f32.mrb[0].mxu0
      %v842 = vadd.f32 0.0, %v841
      %v843 = vpop.f32.mrb[0].mxu0
      %v844 = vadd.f32 0.0, %v843
      %845 = vmatprep.mubr.f32.mxu0 0.0
      %846 = vmatmul.mubr.f32.gmra.mrb[0].mxu0 %v239
      %v847 = vpop.f32.mrb[0].mxu0
      %v848 = vadd.f32 0.0, %v847
      %v849 = vpop.f32.mrb[0].mxu0
      %v850 = vadd.f32 0.0, %v849
      %851 = vmatprep.mubr.f32.mxu0 0.0
      %852 = vmatmul.mubr.f32.gmra.mrb[0].mxu0 %v242
      %v853 = vpop.f32.mrb[0].mxu0
      %v854 = vadd.f32 0.0, %v853
      %v855 = vpop.f32.mrb[0].mxu0
      %v856 = vadd.f32 0.0, %v855
      %857 = vmatprep.mubr.f32.mxu0 0.0
      %858 = vmatmul.mubr.f32.gmra.mrb[0].mxu0 %v245
      %v859 = vpop.f32.mrb[0].mxu0
      %v860 = vadd.f32 0.0, %v859
      %v861 = vpop.f32.mrb[0].mxu0
      %v862 = vadd.f32 0.0, %v861
      %863 = vmatprep.mubr.f32.mxu0 0.0
      %864 = vmatmul.mubr.f32.gmra.mrb[0].mxu0 %v248
      %v865 = vpop.f32.mrb[0].mxu0
      %v866 = vadd.f32 0.0, %v865
      %v867 = vpop.f32.mrb[0].mxu0
      %v868 = vadd.f32 0.0, %v867
      %869 = vmatprep.mubr.f32.mxu0 0.0
      %870 = vmatmul.mubr.f32.gmra.mrb[0].mxu0 %v251
      %v871 = vpop.f32.mrb[0].mxu0
      %v872 = vadd.f32 0.0, %v871
      %v873 = vpop.f32.mrb[0].mxu0
      %v874 = vadd.f32 0.0, %v873
      %875 = vmatprep.mubr.f32.mxu0 0.0
      %876 = vmatmul.mubr.f32.gmra.mrb[0].mxu0 %v254
      %v877 = vpop.f32.mrb[0].mxu0
      %v878 = vadd.f32 0.0, %v877
      %v879 = vpop.f32.mrb[0].mxu0
      %v880 = vadd.f32 0.0, %v879
      %881 = vmatprep.mubr.f32.mxu0 0.0
      %882 = vmatmul.mubr.f32.gmra.mrb[0].mxu0 %v257
      %v883 = vpop.f32.mrb[0].mxu0
      %v884 = vadd.f32 0.0, %v883
      %v885 = vpop.f32.mrb[0].mxu0
      %v886 = vadd.f32 0.0, %v885
      %887 = vmatprep.mubr.f32.mxu0 0.0
      %888 = vmatmul.mubr.f32.gmra.mrb[0].mxu0 %v260
      %v889 = vpop.f32.mrb[0].mxu0
      %v890 = vadd.f32 0.0, %v889
      %v891 = vpop.f32.mrb[0].mxu0
      %v892 = vadd.f32 0.0, %v891
      %893 = vmatprep.mubr.f32.mxu0 0.0
      %894 = vmatmul.mubr.f32.gmra.mrb[0].mxu0 %v263
      %v895 = vpop.f32.mrb[0].mxu0
      %v896 = vadd.f32 0.0, %v895
      %v897 = vpop.f32.mrb[0].mxu0
      %v898 = vadd.f32 0.0, %v897
      %899 = vmatprep.mubr.f32.mxu0 0.0
      %900 = vmatmul.mubr.f32.gmra.mrb[0].mxu0 %v266
      %v901 = vpop.f32.mrb[0].mxu0
      %v902 = vadd.f32 0.0, %v901
      %v903 = vpop.f32.mrb[0].mxu0
      %v904 = vadd.f32 0.0, %v903
      %905 = vmatprep.mubr.f32.mxu0 0.0
      %906 = vmatmul.mubr.f32.gmra.mrb[0].mxu0 %v269
      %v907 = vpop.f32.mrb[0].mxu0
      %v908 = vadd.f32 0.0, %v907
      %v909 = vpop.f32.mrb[0].mxu0
      %v910 = vadd.f32 0.0, %v909
      %911 = vmatprep.mubr.f32.mxu0 0.0
      %912 = vmatmul.mubr.f32.gmra.mrb[0].mxu0 %v272
      %v913 = vpop.f32.mrb[0].mxu0
      %v914 = vadd.f32 0.0, %v913
      %v915 = vpop.f32.mrb[0].mxu0
      %v916 = vadd.f32 0.0, %v915
      %917 = vdwg.mxu0
      %v918 = vmul.f32 %v201, %v201
      %v919 = vmul.f32 %v202, %v202
      %v920 = vmul.f32 %v203, %v203
      %v921 = vmul.f32 %v204, %v204
      %v922 = vmul.f32 %v205, %v205
      %v923 = vmul.f32 %v206, %v206
      %v924 = vmul.f32 %v207, %v207
      %v925 = vmul.f32 %v208, %v208
      %v926 = vmul.f32 %v209, %v209
      %v927 = vmul.f32 %v210, %v210
      %v928 = vmul.f32 %v211, %v211
      %v929 = vmul.f32 %v212, %v212
      %v930 = vmul.f32 %v213, %v213
      %v931 = vmul.f32 %v214, %v214
      %v932 = vmul.f32 %v215, %v215
      %v933 = vmul.f32 %v216, %v216
      %950 = vrot.lane.b32.xlu0 %v918, 127
      %v951 = vpop.permute.xlu0 %950
      %952 = vrot.lane.b32.xlu0 %v919, 127
      %v953 = vpop.permute.xlu0 %952
      %954 = vrot.lane.b32.xlu0 %v920, 127
      %v955 = vpop.permute.xlu0 %954
      %956 = vrot.lane.b32.xlu0 %v921, 127
      %v957 = vpop.permute.xlu0 %956
      %958 = vrot.lane.b32.xlu0 %v922, 127
      %v959 = vpop.permute.xlu0 %958
      %960 = vrot.lane.b32.xlu0 %v923, 127
      %v961 = vpop.permute.xlu0 %960
      %962 = vrot.lane.b32.xlu0 %v924, 127
      %v963 = vpop.permute.xlu0 %962
      %964 = vrot.lane.b32.xlu0 %v925, 127
      %v965 = vpop.permute.xlu0 %964
      %966 = vrot.lane.b32.xlu0 %v926, 127
      %v967 = vpop.permute.xlu0 %966
      %968 = vrot.lane.b32.xlu0 %v927, 127
      %v969 = vpop.permute.xlu0 %968
      %970 = vrot.lane.b32.xlu0 %v928, 127
      %v971 = vpop.permute.xlu0 %970
      %972 = vrot.lane.b32.xlu0 %v929, 127
      %v973 = vpop.permute.xlu0 %972
      %974 = vrot.lane.b32.xlu0 %v930, 127
      %v975 = vpop.permute.xlu0 %974
      %976 = vrot.lane.b32.xlu0 %v931, 127
      %v977 = vpop.permute.xlu0 %976
      %978 = vrot.lane.b32.xlu0 %v932, 127
      %v979 = vpop.permute.xlu0 %978
      %980 = vrot.lane.b32.xlu0 %v933, 127
      %v981 = vpop.permute.xlu0 %980
      %v998 = vadd.f32 %v918, %v951
      %v999 = vadd.f32 %v919, %v953
      %v1000 = vadd.f32 %v920, %v955
      %v1001 = vadd.f32 %v921, %v957
      %v1002 = vadd.f32 %v922, %v959
      %v1003 = vadd.f32 %v923, %v961
      %v1004 = vadd.f32 %v924, %v963
      %v1005 = vadd.f32 %v925, %v965
      %v1006 = vadd.f32 %v926, %v967
      %v1007 = vadd.f32 %v927, %v969
      %v1008 = vadd.f32 %v928, %v971
      %v1009 = vadd.f32 %v929, %v973
      %v1010 = vadd.f32 %v930, %v975
      %v1011 = vadd.f32 %v931, %v977
      %v1012 = vadd.f32 %v932, %v979
      %v1013 = vadd.f32 %v933, %v981
      %1014 = vrot.lane.b32.xlu0 %v918, 126
      %v1015 = vpop.permute.xlu0 %1014
      %1016 = vrot.lane.b32.xlu0 %v919, 126
      %v1017 = vpop.permute.xlu0 %1016
      %1018 = vrot.lane.b32.xlu0 %v920, 126
      %v1019 = vpop.permute.xlu0 %1018
      %1020 = vrot.lane.b32.xlu0 %v921, 126
      %v1021 = vpop.permute.xlu0 %1020
      %1022 = vrot.lane.b32.xlu0 %v922, 126
      %v1023 = vpop.permute.xlu0 %1022
      %1024 = vrot.lane.b32.xlu0 %v923, 126
      %v1025 = vpop.permute.xlu0 %1024
      %1026 = vrot.lane.b32.xlu0 %v924, 126
      %v1027 = vpop.permute.xlu0 %1026
      %1028 = vrot.lane.b32.xlu0 %v925, 126
      %v1029 = vpop.permute.xlu0 %1028
      %1030 = vrot.lane.b32.xlu0 %v926, 126
      %v1031 = vpop.permute.xlu0 %1030
      %1032 = vrot.lane.b32.xlu0 %v927, 126
      %v1033 = vpop.permute.xlu0 %1032
      %1034 = vrot.lane.b32.xlu0 %v928, 126
      %v1035 = vpop.permute.xlu0 %1034
      %1036 = vrot.lane.b32.xlu0 %v929, 126
      %v1037 = vpop.permute.xlu0 %1036
      %1038 = vrot.lane.b32.xlu0 %v930, 126
      %v1039 = vpop.permute.xlu0 %1038
      %1040 = vrot.lane.b32.xlu0 %v931, 126
      %v1041 = vpop.permute.xlu0 %1040
      %1042 = vrot.lane.b32.xlu0 %v932, 126
      %v1043 = vpop.permute.xlu0 %1042
      %1044 = vrot.lane.b32.xlu0 %v933, 126
      %v1045 = vpop.permute.xlu0 %1044
      %v1062 = vadd.f32 %v998, %v1015
      %v1063 = vadd.f32 %v999, %v1017
      %v1064 = vadd.f32 %v1000, %v1019
      %v1065 = vadd.f32 %v1001, %v1021
      %v1066 = vadd.f32 %v1002, %v1023
      %v1067 = vadd.f32 %v1003, %v1025
      %v1068 = vadd.f32 %v1004, %v1027
      %v1069 = vadd.f32 %v1005, %v1029
      %v1070 = vadd.f32 %v1006, %v1031
      %v1071 = vadd.f32 %v1007, %v1033
      %v1072 = vadd.f32 %v1008, %v1035
      %v1073 = vadd.f32 %v1009, %v1037
      %v1074 = vadd.f32 %v1010, %v1039
      %v1075 = vadd.f32 %v1011, %v1041
      %v1076 = vadd.f32 %v1012, %v1043
      %v1077 = vadd.f32 %v1013, %v1045
      %v1078 = vld [vmem:[%s2] sm:$0xff]
      %1080 = vset.pattern.permute.xlu0 0
      %1081 = vperm.xlu0 %1080, %v1062
      %v1082 = vpop.permute.xlu0 %1081
      %1085 = vset.pattern.permute.xlu0 0
      %1086 = vperm.xlu0 %1085, %v1063
      %v1087 = vpop.permute.xlu0 %1086
      %1090 = vset.pattern.permute.xlu0 0
      %1091 = vperm.xlu0 %1090, %v1064
      %v1092 = vpop.permute.xlu0 %1091
      %1095 = vset.pattern.permute.xlu0 0
      %1096 = vperm.xlu0 %1095, %v1065
      %v1097 = vpop.permute.xlu0 %1096
      %1100 = vset.pattern.permute.xlu0 0
      %1101 = vperm.xlu0 %1100, %v1066
      %v1102 = vpop.permute.xlu0 %1101
      %1105 = vset.pattern.permute.xlu0 0
      %1106 = vperm.xlu0 %1105, %v1067
      %v1107 = vpop.permute.xlu0 %1106
      %1110 = vset.pattern.permute.xlu0 0
      %1111 = vperm.xlu0 %1110, %v1068
      %v1112 = vpop.permute.xlu0 %1111
      %1115 = vset.pattern.permute.xlu0 0
      %1116 = vperm.xlu0 %1115, %v1069
      %v1117 = vpop.permute.xlu0 %1116
      %1120 = vset.pattern.permute.xlu0 0
      %1121 = vperm.xlu0 %1120, %v1070
      %v1122 = vpop.permute.xlu0 %1121
      %1125 = vset.pattern.permute.xlu0 0
      %1126 = vperm.xlu0 %1125, %v1071
      %v1127 = vpop.permute.xlu0 %1126
      %1130 = vset.pattern.permute.xlu0 0
      %1131 = vperm.xlu0 %1130, %v1072
      %v1132 = vpop.permute.xlu0 %1131
      %1135 = vset.pattern.permute.xlu0 0
      %1136 = vperm.xlu0 %1135, %v1073
      %v1137 = vpop.permute.xlu0 %1136
      %1140 = vset.pattern.permute.xlu0 0
      %1141 = vperm.xlu0 %1140, %v1074
      %v1142 = vpop.permute.xlu0 %1141
      %1145 = vset.pattern.permute.xlu0 0
      %1146 = vperm.xlu0 %1145, %v1075
      %v1147 = vpop.permute.xlu0 %1146
      %1150 = vset.pattern.permute.xlu0 0
      %1151 = vperm.xlu0 %1150, %v1076
      %v1152 = vpop.permute.xlu0 %1151
      %1155 = vset.pattern.permute.xlu0 0
      %1156 = vperm.xlu0 %1155, %v1077
      %v1157 = vpop.permute.xlu0 %1156
      %v1160 = vlaneseq
      %v1161 = vshrl.u32 %v1160, 7
      %v1162 = vsub.s32 0, %v1161
      %v1163 = vrot.slane %v1078, %v1162
      %v1164 = vlaneseq
      %v1165 = vshrl.u32 %v1164, 7
      %v1166 = vsub.s32 1, %v1165
      %v1167 = vrot.slane %v1078, %v1166
      %v1168 = vlaneseq
      %v1169 = vshrl.u32 %v1168, 7
      %v1170 = vsub.s32 2, %v1169
      %v1171 = vrot.slane %v1078, %v1170
      %v1172 = vlaneseq
      %v1173 = vshrl.u32 %v1172, 7
      %v1174 = vsub.s32 3, %v1173
      %v1175 = vrot.slane %v1078, %v1174
      %v1176 = vlaneseq
      %v1177 = vshrl.u32 %v1176, 7
      %v1178 = vsub.s32 4, %v1177
      %v1179 = vrot.slane %v1078, %v1178
      %v1180 = vlaneseq
      %v1181 = vshrl.u32 %v1180, 7
      %v1182 = vsub.s32 5, %v1181
      %v1183 = vrot.slane %v1078, %v1182
      %v1184 = vlaneseq
      %v1185 = vshrl.u32 %v1184, 7
      %v1186 = vsub.s32 6, %v1185
      %v1187 = vrot.slane %v1078, %v1186
      %v1188 = vlaneseq
      %v1189 = vshrl.u32 %v1188, 7
      %v1190 = vsub.s32 7, %v1189
      %v1191 = vrot.slane %v1078, %v1190
      %v1200 = vadd.f32 %v1082, %v1163
      %v1201 = vadd.f32 %v1082, %v1167
      %v1202 = vadd.f32 %v1082, %v1171
      %v1203 = vadd.f32 %v1082, %v1175
      %v1204 = vadd.f32 %v1082, %v1179
      %v1205 = vadd.f32 %v1082, %v1183
      %v1206 = vadd.f32 %v1082, %v1187
      %v1207 = vadd.f32 %v1082, %v1191
      %v1208 = vadd.f32 %v1087, %v1163
      %v1209 = vadd.f32 %v1087, %v1167
      %v1210 = vadd.f32 %v1087, %v1171
      %v1211 = vadd.f32 %v1087, %v1175
      %v1212 = vadd.f32 %v1087, %v1179
      %v1213 = vadd.f32 %v1087, %v1183
      %v1214 = vadd.f32 %v1087, %v1187
      %v1215 = vadd.f32 %v1087, %v1191
      %v1216 = vadd.f32 %v1092, %v1163
      %v1217 = vadd.f32 %v1092, %v1167
      %v1218 = vadd.f32 %v1092, %v1171
      %v1219 = vadd.f32 %v1092, %v1175
      %v1220 = vadd.f32 %v1092, %v1179
      %v1221 = vadd.f32 %v1092, %v1183
      %v1222 = vadd.f32 %v1092, %v1187
      %v1223 = vadd.f32 %v1092, %v1191
      %v1224 = vadd.f32 %v1097, %v1163
      %v1225 = vadd.f32 %v1097, %v1167
      %v1226 = vadd.f32 %v1097, %v1171
      %v1227 = vadd.f32 %v1097, %v1175
      %v1228 = vadd.f32 %v1097, %v1179
      %v1229 = vadd.f32 %v1097, %v1183
      %v1230 = vadd.f32 %v1097, %v1187
      %v1231 = vadd.f32 %v1097, %v1191
      %v1232 = vadd.f32 %v1102, %v1163
      %v1233 = vadd.f32 %v1102, %v1167
      %v1234 = vadd.f32 %v1102, %v1171
      %v1235 = vadd.f32 %v1102, %v1175
      %v1236 = vadd.f32 %v1102, %v1179
      %v1237 = vadd.f32 %v1102, %v1183
      %v1238 = vadd.f32 %v1102, %v1187
      %v1239 = vadd.f32 %v1102, %v1191
      %v1240 = vadd.f32 %v1107, %v1163
      %v1241 = vadd.f32 %v1107, %v1167
      %v1242 = vadd.f32 %v1107, %v1171
      %v1243 = vadd.f32 %v1107, %v1175
      %v1244 = vadd.f32 %v1107, %v1179
      %v1245 = vadd.f32 %v1107, %v1183
      %v1246 = vadd.f32 %v1107, %v1187
      %v1247 = vadd.f32 %v1107, %v1191
      %v1248 = vadd.f32 %v1112, %v1163
      %v1249 = vadd.f32 %v1112, %v1167
      %v1250 = vadd.f32 %v1112, %v1171
      %v1251 = vadd.f32 %v1112, %v1175
      %v1252 = vadd.f32 %v1112, %v1179
      %v1253 = vadd.f32 %v1112, %v1183
      %v1254 = vadd.f32 %v1112, %v1187
      %v1255 = vadd.f32 %v1112, %v1191
      %v1256 = vadd.f32 %v1117, %v1163
      %v1257 = vadd.f32 %v1117, %v1167
      %v1258 = vadd.f32 %v1117, %v1171
      %v1259 = vadd.f32 %v1117, %v1175
      %v1260 = vadd.f32 %v1117, %v1179
      %v1261 = vadd.f32 %v1117, %v1183
      %v1262 = vadd.f32 %v1117, %v1187
      %v1263 = vadd.f32 %v1117, %v1191
      %v1264 = vadd.f32 %v1122, %v1163
      %v1265 = vadd.f32 %v1122, %v1167
      %v1266 = vadd.f32 %v1122, %v1171
      %v1267 = vadd.f32 %v1122, %v1175
      %v1268 = vadd.f32 %v1122, %v1179
      %v1269 = vadd.f32 %v1122, %v1183
      %v1270 = vadd.f32 %v1122, %v1187
      %v1271 = vadd.f32 %v1122, %v1191
      %v1272 = vadd.f32 %v1127, %v1163
      %v1273 = vadd.f32 %v1127, %v1167
      %v1274 = vadd.f32 %v1127, %v1171
      %v1275 = vadd.f32 %v1127, %v1175
      %v1276 = vadd.f32 %v1127, %v1179
      %v1277 = vadd.f32 %v1127, %v1183
      %v1278 = vadd.f32 %v1127, %v1187
      %v1279 = vadd.f32 %v1127, %v1191
      %v1280 = vadd.f32 %v1132, %v1163
      %v1281 = vadd.f32 %v1132, %v1167
      %v1282 = vadd.f32 %v1132, %v1171
      %v1283 = vadd.f32 %v1132, %v1175
      %v1284 = vadd.f32 %v1132, %v1179
      %v1285 = vadd.f32 %v1132, %v1183
      %v1286 = vadd.f32 %v1132, %v1187
      %v1287 = vadd.f32 %v1132, %v1191
      %v1288 = vadd.f32 %v1137, %v1163
      %v1289 = vadd.f32 %v1137, %v1167
      %v1290 = vadd.f32 %v1137, %v1171
      %v1291 = vadd.f32 %v1137, %v1175
      %v1292 = vadd.f32 %v1137, %v1179
      %v1293 = vadd.f32 %v1137, %v1183
      %v1294 = vadd.f32 %v1137, %v1187
      %v1295 = vadd.f32 %v1137, %v1191
      %v1296 = vadd.f32 %v1142, %v1163
      %v1297 = vadd.f32 %v1142, %v1167
      %v1298 = vadd.f32 %v1142, %v1171
      %v1299 = vadd.f32 %v1142, %v1175
      %v1300 = vadd.f32 %v1142, %v1179
      %v1301 = vadd.f32 %v1142, %v1183
      %v1302 = vadd.f32 %v1142, %v1187
      %v1303 = vadd.f32 %v1142, %v1191
      %v1304 = vadd.f32 %v1147, %v1163
      %v1305 = vadd.f32 %v1147, %v1167
      %v1306 = vadd.f32 %v1147, %v1171
      %v1307 = vadd.f32 %v1147, %v1175
      %v1308 = vadd.f32 %v1147, %v1179
      %v1309 = vadd.f32 %v1147, %v1183
      %v1310 = vadd.f32 %v1147, %v1187
      %v1311 = vadd.f32 %v1147, %v1191
      %v1312 = vadd.f32 %v1152, %v1163
      %v1313 = vadd.f32 %v1152, %v1167
      %v1314 = vadd.f32 %v1152, %v1171
      %v1315 = vadd.f32 %v1152, %v1175
      %v1316 = vadd.f32 %v1152, %v1179
      %v1317 = vadd.f32 %v1152, %v1183
      %v1318 = vadd.f32 %v1152, %v1187
      %v1319 = vadd.f32 %v1152, %v1191
      %v1320 = vadd.f32 %v1157, %v1163
      %v1321 = vadd.f32 %v1157, %v1167
      %v1322 = vadd.f32 %v1157, %v1171
      %v1323 = vadd.f32 %v1157, %v1175
      %v1324 = vadd.f32 %v1157, %v1179
      %v1325 = vadd.f32 %v1157, %v1183
      %v1326 = vadd.f32 %v1157, %v1187
      %v1327 = vadd.f32 %v1157, %v1191
      %v1328 = vmul.f32 %v341, 2.0
      %v1329 = vmul.f32 %v343, 2.0
      %v1330 = vmul.f32 %v502, 2.0
      %v1331 = vmul.f32 %v504, 2.0
      %v1332 = vmul.f32 %v663, 2.0
      %v1333 = vmul.f32 %v665, 2.0
      %v1334 = vmul.f32 %v824, 2.0
      %v1335 = vmul.f32 %v826, 2.0
      %v1336 = vmul.f32 %v347, 2.0
      %v1337 = vmul.f32 %v349, 2.0
      %v1338 = vmul.f32 %v508, 2.0
      %v1339 = vmul.f32 %v510, 2.0
      %v1340 = vmul.f32 %v669, 2.0
      %v1341 = vmul.f32 %v671, 2.0
      %v1342 = vmul.f32 %v830, 2.0
      %v1343 = vmul.f32 %v832, 2.0
      %v1344 = vmul.f32 %v353, 2.0
      %v1345 = vmul.f32 %v355, 2.0
      %v1346 = vmul.f32 %v514, 2.0
      %v1347 = vmul.f32 %v516, 2.0
      %v1348 = vmul.f32 %v675, 2.0
      %v1349 = vmul.f32 %v677, 2.0
      %v1350 = vmul.f32 %v836, 2.0
      %v1351 = vmul.f32 %v838, 2.0
      %v1352 = vmul.f32 %v359, 2.0
      %v1353 = vmul.f32 %v361, 2.0
      %v1354 = vmul.f32 %v520, 2.0
      %v1355 = vmul.f32 %v522, 2.0
      %v1356 = vmul.f32 %v681, 2.0
      %v1357 = vmul.f32 %v683, 2.0
      %v1358 = vmul.f32 %v842, 2.0
      %v1359 = vmul.f32 %v844, 2.0
      %v1360 = vmul.f32 %v365, 2.0
      %v1361 = vmul.f32 %v367, 2.0
      %v1362 = vmul.f32 %v526, 2.0
      %v1363 = vmul.f32 %v528, 2.0
      %v1364 = vmul.f32 %v687, 2.0
      %v1365 = vmul.f32 %v689, 2.0
      %v1366 = vmul.f32 %v848, 2.0
      %v1367 = vmul.f32 %v850, 2.0
      %v1368 = vmul.f32 %v371, 2.0
      %v1369 = vmul.f32 %v373, 2.0
      %v1370 = vmul.f32 %v532, 2.0
      %v1371 = vmul.f32 %v534, 2.0
      %v1372 = vmul.f32 %v693, 2.0
      %v1373 = vmul.f32 %v695, 2.0
      %v1374 = vmul.f32 %v854, 2.0
      %v1375 = vmul.f32 %v856, 2.0
      %v1376 = vmul.f32 %v377, 2.0
      %v1377 = vmul.f32 %v379, 2.0
      %v1378 = vmul.f32 %v538, 2.0
      %v1379 = vmul.f32 %v540, 2.0
      %v1380 = vmul.f32 %v699, 2.0
      %v1381 = vmul.f32 %v701, 2.0
      %v1382 = vmul.f32 %v860, 2.0
      %v1383 = vmul.f32 %v862, 2.0
      %v1384 = vmul.f32 %v383, 2.0
      %v1385 = vmul.f32 %v385, 2.0
      %v1386 = vmul.f32 %v544, 2.0
      %v1387 = vmul.f32 %v546, 2.0
      %v1388 = vmul.f32 %v705, 2.0
      %v1389 = vmul.f32 %v707, 2.0
      %v1390 = vmul.f32 %v866, 2.0
      %v1391 = vmul.f32 %v868, 2.0
      %v1392 = vmul.f32 %v389, 2.0
      %v1393 = vmul.f32 %v391, 2.0
      %v1394 = vmul.f32 %v550, 2.0
      %v1395 = vmul.f32 %v552, 2.0
      %v1396 = vmul.f32 %v711, 2.0
      %v1397 = vmul.f32 %v713, 2.0
      %v1398 = vmul.f32 %v872, 2.0
      %v1399 = vmul.f32 %v874, 2.0
      %v1400 = vmul.f32 %v395, 2.0
      %v1401 = vmul.f32 %v397, 2.0
      %v1402 = vmul.f32 %v556, 2.0
      %v1403 = vmul.f32 %v558, 2.0
      %v1404 = vmul.f32 %v717, 2.0
      %v1405 = vmul.f32 %v719, 2.0
      %v1406 = vmul.f32 %v878, 2.0
      %v1407 = vmul.f32 %v880, 2.0
      %v1408 = vmul.f32 %v401, 2.0
      %v1409 = vmul.f32 %v403, 2.0
      %v1410 = vmul.f32 %v562, 2.0
      %v1411 = vmul.f32 %v564, 2.0
      %v1412 = vmul.f32 %v723, 2.0
      %v1413 = vmul.f32 %v725, 2.0
      %v1414 = vmul.f32 %v884, 2.0
      %v1415 = vmul.f32 %v886, 2.0
      %v1416 = vmul.f32 %v407, 2.0
      %v1417 = vmul.f32 %v409, 2.0
      %v1418 = vmul.f32 %v568, 2.0
      %v1419 = vmul.f32 %v570, 2.0
      %v1420 = vmul.f32 %v729, 2.0
      %v1421 = vmul.f32 %v731, 2.0
      %v1422 = vmul.f32 %v890, 2.0
      %v1423 = vmul.f32 %v892, 2.0
      %v1424 = vmul.f32 %v413, 2.0
      %v1425 = vmul.f32 %v415, 2.0
      %v1426 = vmul.f32 %v574, 2.0
      %v1427 = vmul.f32 %v576, 2.0
      %v1428 = vmul.f32 %v735, 2.0
      %v1429 = vmul.f32 %v737, 2.0
      %v1430 = vmul.f32 %v896, 2.0
      %v1431 = vmul.f32 %v898, 2.0
      %v1432 = vmul.f32 %v419, 2.0
      %v1433 = vmul.f32 %v421, 2.0
      %v1434 = vmul.f32 %v580, 2.0
      %v1435 = vmul.f32 %v582, 2.0
      %v1436 = vmul.f32 %v741, 2.0
      %v1437 = vmul.f32 %v743, 2.0
      %v1438 = vmul.f32 %v902, 2.0
      %v1439 = vmul.f32 %v904, 2.0
      %v1440 = vmul.f32 %v425, 2.0
      %v1441 = vmul.f32 %v427, 2.0
      %v1442 = vmul.f32 %v586, 2.0
      %v1443 = vmul.f32 %v588, 2.0
      %v1444 = vmul.f32 %v747, 2.0
      %v1445 = vmul.f32 %v749, 2.0
      %v1446 = vmul.f32 %v908, 2.0
      %v1447 = vmul.f32 %v910, 2.0
      %v1448 = vmul.f32 %v431, 2.0
      %v1449 = vmul.f32 %v433, 2.0
      %v1450 = vmul.f32 %v592, 2.0
      %v1451 = vmul.f32 %v594, 2.0
      %v1452 = vmul.f32 %v753, 2.0
      %v1453 = vmul.f32 %v755, 2.0
      %v1454 = vmul.f32 %v914, 2.0
      %v1455 = vmul.f32 %v916, 2.0
      %v1456 = vsub.f32 %v1200, %v1328
      %v1457 = vsub.f32 %v1201, %v1329
      %v1458 = vsub.f32 %v1202, %v1330
      %v1459 = vsub.f32 %v1203, %v1331
      %v1460 = vsub.f32 %v1204, %v1332
      %v1461 = vsub.f32 %v1205, %v1333
      %v1462 = vsub.f32 %v1206, %v1334
      %v1463 = vsub.f32 %v1207, %v1335
      %v1464 = vsub.f32 %v1208, %v1336
      %v1465 = vsub.f32 %v1209, %v1337
      %v1466 = vsub.f32 %v1210, %v1338
      %v1467 = vsub.f32 %v1211, %v1339
      %v1468 = vsub.f32 %v1212, %v1340
      %v1469 = vsub.f32 %v1213, %v1341
      %v1470 = vsub.f32 %v1214, %v1342
      %v1471 = vsub.f32 %v1215, %v1343
      %v1472 = vsub.f32 %v1216, %v1344
      %v1473 = vsub.f32 %v1217, %v1345
      %v1474 = vsub.f32 %v1218, %v1346
      %v1475 = vsub.f32 %v1219, %v1347
      %v1476 = vsub.f32 %v1220, %v1348
      %v1477 = vsub.f32 %v1221, %v1349
      %v1478 = vsub.f32 %v1222, %v1350
      %v1479 = vsub.f32 %v1223, %v1351
      %v1480 = vsub.f32 %v1224, %v1352
      %v1481 = vsub.f32 %v1225, %v1353
      %v1482 = vsub.f32 %v1226, %v1354
      %v1483 = vsub.f32 %v1227, %v1355
      %v1484 = vsub.f32 %v1228, %v1356
      %v1485 = vsub.f32 %v1229, %v1357
      %v1486 = vsub.f32 %v1230, %v1358
      %v1487 = vsub.f32 %v1231, %v1359
      %v1488 = vsub.f32 %v1232, %v1360
      %v1489 = vsub.f32 %v1233, %v1361
      %v1490 = vsub.f32 %v1234, %v1362
      %v1491 = vsub.f32 %v1235, %v1363
      %v1492 = vsub.f32 %v1236, %v1364
      %v1493 = vsub.f32 %v1237, %v1365
      %v1494 = vsub.f32 %v1238, %v1366
      %v1495 = vsub.f32 %v1239, %v1367
      %v1496 = vsub.f32 %v1240, %v1368
      %v1497 = vsub.f32 %v1241, %v1369
      %v1498 = vsub.f32 %v1242, %v1370
      %v1499 = vsub.f32 %v1243, %v1371
      %v1500 = vsub.f32 %v1244, %v1372
      %v1501 = vsub.f32 %v1245, %v1373
      %v1502 = vsub.f32 %v1246, %v1374
      %v1503 = vsub.f32 %v1247, %v1375
      %v1504 = vsub.f32 %v1248, %v1376
      %v1505 = vsub.f32 %v1249, %v1377
      %v1506 = vsub.f32 %v1250, %v1378
      %v1507 = vsub.f32 %v1251, %v1379
      %v1508 = vsub.f32 %v1252, %v1380
      %v1509 = vsub.f32 %v1253, %v1381
      %v1510 = vsub.f32 %v1254, %v1382
      %v1511 = vsub.f32 %v1255, %v1383
      %v1512 = vsub.f32 %v1256, %v1384
      %v1513 = vsub.f32 %v1257, %v1385
      %v1514 = vsub.f32 %v1258, %v1386
      %v1515 = vsub.f32 %v1259, %v1387
      %v1516 = vsub.f32 %v1260, %v1388
      %v1517 = vsub.f32 %v1261, %v1389
      %v1518 = vsub.f32 %v1262, %v1390
      %v1519 = vsub.f32 %v1263, %v1391
      %v1520 = vsub.f32 %v1264, %v1392
      %v1521 = vsub.f32 %v1265, %v1393
      %v1522 = vsub.f32 %v1266, %v1394
      %v1523 = vsub.f32 %v1267, %v1395
      %v1524 = vsub.f32 %v1268, %v1396
      %v1525 = vsub.f32 %v1269, %v1397
      %v1526 = vsub.f32 %v1270, %v1398
      %v1527 = vsub.f32 %v1271, %v1399
      %v1528 = vsub.f32 %v1272, %v1400
      %v1529 = vsub.f32 %v1273, %v1401
      %v1530 = vsub.f32 %v1274, %v1402
      %v1531 = vsub.f32 %v1275, %v1403
      %v1532 = vsub.f32 %v1276, %v1404
      %v1533 = vsub.f32 %v1277, %v1405
      %v1534 = vsub.f32 %v1278, %v1406
      %v1535 = vsub.f32 %v1279, %v1407
      %v1536 = vsub.f32 %v1280, %v1408
      %v1537 = vsub.f32 %v1281, %v1409
      %v1538 = vsub.f32 %v1282, %v1410
      %v1539 = vsub.f32 %v1283, %v1411
      %v1540 = vsub.f32 %v1284, %v1412
      %v1541 = vsub.f32 %v1285, %v1413
      %v1542 = vsub.f32 %v1286, %v1414
      %v1543 = vsub.f32 %v1287, %v1415
      %v1544 = vsub.f32 %v1288, %v1416
      %v1545 = vsub.f32 %v1289, %v1417
      %v1546 = vsub.f32 %v1290, %v1418
      %v1547 = vsub.f32 %v1291, %v1419
      %v1548 = vsub.f32 %v1292, %v1420
      %v1549 = vsub.f32 %v1293, %v1421
      %v1550 = vsub.f32 %v1294, %v1422
      %v1551 = vsub.f32 %v1295, %v1423
      %v1552 = vsub.f32 %v1296, %v1424
      %v1553 = vsub.f32 %v1297, %v1425
      %v1554 = vsub.f32 %v1298, %v1426
      %v1555 = vsub.f32 %v1299, %v1427
      %v1556 = vsub.f32 %v1300, %v1428
      %v1557 = vsub.f32 %v1301, %v1429
      %v1558 = vsub.f32 %v1302, %v1430
      %v1559 = vsub.f32 %v1303, %v1431
      %v1560 = vsub.f32 %v1304, %v1432
      %v1561 = vsub.f32 %v1305, %v1433
      %v1562 = vsub.f32 %v1306, %v1434
      %v1563 = vsub.f32 %v1307, %v1435
      %v1564 = vsub.f32 %v1308, %v1436
      %v1565 = vsub.f32 %v1309, %v1437
      %v1566 = vsub.f32 %v1310, %v1438
      %v1567 = vsub.f32 %v1311, %v1439
      %v1568 = vsub.f32 %v1312, %v1440
      %v1569 = vsub.f32 %v1313, %v1441
      %v1570 = vsub.f32 %v1314, %v1442
      %v1571 = vsub.f32 %v1315, %v1443
      %v1572 = vsub.f32 %v1316, %v1444
      %v1573 = vsub.f32 %v1317, %v1445
      %v1574 = vsub.f32 %v1318, %v1446
      %v1575 = vsub.f32 %v1319, %v1447
      %v1576 = vsub.f32 %v1320, %v1448
      %v1577 = vsub.f32 %v1321, %v1449
      %v1578 = vsub.f32 %v1322, %v1450
      %v1579 = vsub.f32 %v1323, %v1451
      %v1580 = vsub.f32 %v1324, %v1452
      %v1581 = vsub.f32 %v1325, %v1453
      %v1582 = vsub.f32 %v1326, %v1454
      %v1583 = vsub.f32 %v1327, %v1455
      %vm1584 = vcmp.lt.f32.partialorder %v1456, 0.0625
      %vm1585 = vcmp.lt.f32.partialorder %v1457, 0.0625
      %vm1586 = vcmp.lt.f32.partialorder %v1458, 0.0625
      %vm1587 = vcmp.lt.f32.partialorder %v1459, 0.0625
      %vm1588 = vcmp.lt.f32.partialorder %v1460, 0.0625
      %vm1589 = vcmp.lt.f32.partialorder %v1461, 0.0625
      %vm1590 = vcmp.lt.f32.partialorder %v1462, 0.0625
      %vm1591 = vcmp.lt.f32.partialorder %v1463, 0.0625
      %vm1592 = vcmp.lt.f32.partialorder %v1464, 0.0625
      %vm1593 = vcmp.lt.f32.partialorder %v1465, 0.0625
      %vm1594 = vcmp.lt.f32.partialorder %v1466, 0.0625
      %vm1595 = vcmp.lt.f32.partialorder %v1467, 0.0625
      %vm1596 = vcmp.lt.f32.partialorder %v1468, 0.0625
      %vm1597 = vcmp.lt.f32.partialorder %v1469, 0.0625
      %vm1598 = vcmp.lt.f32.partialorder %v1470, 0.0625
      %vm1599 = vcmp.lt.f32.partialorder %v1471, 0.0625
      %vm1600 = vcmp.lt.f32.partialorder %v1472, 0.0625
      %vm1601 = vcmp.lt.f32.partialorder %v1473, 0.0625
      %vm1602 = vcmp.lt.f32.partialorder %v1474, 0.0625
      %vm1603 = vcmp.lt.f32.partialorder %v1475, 0.0625
      %vm1604 = vcmp.lt.f32.partialorder %v1476, 0.0625
      %vm1605 = vcmp.lt.f32.partialorder %v1477, 0.0625
      %vm1606 = vcmp.lt.f32.partialorder %v1478, 0.0625
      %vm1607 = vcmp.lt.f32.partialorder %v1479, 0.0625
      %vm1608 = vcmp.lt.f32.partialorder %v1480, 0.0625
      %vm1609 = vcmp.lt.f32.partialorder %v1481, 0.0625
      %vm1610 = vcmp.lt.f32.partialorder %v1482, 0.0625
      %vm1611 = vcmp.lt.f32.partialorder %v1483, 0.0625
      %vm1612 = vcmp.lt.f32.partialorder %v1484, 0.0625
      %vm1613 = vcmp.lt.f32.partialorder %v1485, 0.0625
      %vm1614 = vcmp.lt.f32.partialorder %v1486, 0.0625
      %vm1615 = vcmp.lt.f32.partialorder %v1487, 0.0625
      %vm1616 = vcmp.lt.f32.partialorder %v1488, 0.0625
      %vm1617 = vcmp.lt.f32.partialorder %v1489, 0.0625
      %vm1618 = vcmp.lt.f32.partialorder %v1490, 0.0625
      %vm1619 = vcmp.lt.f32.partialorder %v1491, 0.0625
      %vm1620 = vcmp.lt.f32.partialorder %v1492, 0.0625
      %vm1621 = vcmp.lt.f32.partialorder %v1493, 0.0625
      %vm1622 = vcmp.lt.f32.partialorder %v1494, 0.0625
      %vm1623 = vcmp.lt.f32.partialorder %v1495, 0.0625
      %vm1624 = vcmp.lt.f32.partialorder %v1496, 0.0625
      %vm1625 = vcmp.lt.f32.partialorder %v1497, 0.0625
      %vm1626 = vcmp.lt.f32.partialorder %v1498, 0.0625
      %vm1627 = vcmp.lt.f32.partialorder %v1499, 0.0625
      %vm1628 = vcmp.lt.f32.partialorder %v1500, 0.0625
      %vm1629 = vcmp.lt.f32.partialorder %v1501, 0.0625
      %vm1630 = vcmp.lt.f32.partialorder %v1502, 0.0625
      %vm1631 = vcmp.lt.f32.partialorder %v1503, 0.0625
      %vm1632 = vcmp.lt.f32.partialorder %v1504, 0.0625
      %vm1633 = vcmp.lt.f32.partialorder %v1505, 0.0625
      %vm1634 = vcmp.lt.f32.partialorder %v1506, 0.0625
      %vm1635 = vcmp.lt.f32.partialorder %v1507, 0.0625
      %vm1636 = vcmp.lt.f32.partialorder %v1508, 0.0625
      %vm1637 = vcmp.lt.f32.partialorder %v1509, 0.0625
      %vm1638 = vcmp.lt.f32.partialorder %v1510, 0.0625
      %vm1639 = vcmp.lt.f32.partialorder %v1511, 0.0625
      %vm1640 = vcmp.lt.f32.partialorder %v1512, 0.0625
      %vm1641 = vcmp.lt.f32.partialorder %v1513, 0.0625
      %vm1642 = vcmp.lt.f32.partialorder %v1514, 0.0625
      %vm1643 = vcmp.lt.f32.partialorder %v1515, 0.0625
      %vm1644 = vcmp.lt.f32.partialorder %v1516, 0.0625
      %vm1645 = vcmp.lt.f32.partialorder %v1517, 0.0625
      %vm1646 = vcmp.lt.f32.partialorder %v1518, 0.0625
      %vm1647 = vcmp.lt.f32.partialorder %v1519, 0.0625
      %vm1648 = vcmp.lt.f32.partialorder %v1520, 0.0625
      %vm1649 = vcmp.lt.f32.partialorder %v1521, 0.0625
      %vm1650 = vcmp.lt.f32.partialorder %v1522, 0.0625
      %vm1651 = vcmp.lt.f32.partialorder %v1523, 0.0625
      %vm1652 = vcmp.lt.f32.partialorder %v1524, 0.0625
      %vm1653 = vcmp.lt.f32.partialorder %v1525, 0.0625
      %vm1654 = vcmp.lt.f32.partialorder %v1526, 0.0625
      %vm1655 = vcmp.lt.f32.partialorder %v1527, 0.0625
      %vm1656 = vcmp.lt.f32.partialorder %v1528, 0.0625
      %vm1657 = vcmp.lt.f32.partialorder %v1529, 0.0625
      %vm1658 = vcmp.lt.f32.partialorder %v1530, 0.0625
      %vm1659 = vcmp.lt.f32.partialorder %v1531, 0.0625
      %vm1660 = vcmp.lt.f32.partialorder %v1532, 0.0625
      %vm1661 = vcmp.lt.f32.partialorder %v1533, 0.0625
      %vm1662 = vcmp.lt.f32.partialorder %v1534, 0.0625
      %vm1663 = vcmp.lt.f32.partialorder %v1535, 0.0625
      %vm1664 = vcmp.lt.f32.partialorder %v1536, 0.0625
      %vm1665 = vcmp.lt.f32.partialorder %v1537, 0.0625
      %vm1666 = vcmp.lt.f32.partialorder %v1538, 0.0625
      %vm1667 = vcmp.lt.f32.partialorder %v1539, 0.0625
      %vm1668 = vcmp.lt.f32.partialorder %v1540, 0.0625
      %vm1669 = vcmp.lt.f32.partialorder %v1541, 0.0625
      %vm1670 = vcmp.lt.f32.partialorder %v1542, 0.0625
      %vm1671 = vcmp.lt.f32.partialorder %v1543, 0.0625
      %vm1672 = vcmp.lt.f32.partialorder %v1544, 0.0625
      %vm1673 = vcmp.lt.f32.partialorder %v1545, 0.0625
      %vm1674 = vcmp.lt.f32.partialorder %v1546, 0.0625
      %vm1675 = vcmp.lt.f32.partialorder %v1547, 0.0625
      %vm1676 = vcmp.lt.f32.partialorder %v1548, 0.0625
      %vm1677 = vcmp.lt.f32.partialorder %v1549, 0.0625
      %vm1678 = vcmp.lt.f32.partialorder %v1550, 0.0625
      %vm1679 = vcmp.lt.f32.partialorder %v1551, 0.0625
      %vm1680 = vcmp.lt.f32.partialorder %v1552, 0.0625
      %vm1681 = vcmp.lt.f32.partialorder %v1553, 0.0625
      %vm1682 = vcmp.lt.f32.partialorder %v1554, 0.0625
      %vm1683 = vcmp.lt.f32.partialorder %v1555, 0.0625
      %vm1684 = vcmp.lt.f32.partialorder %v1556, 0.0625
      %vm1685 = vcmp.lt.f32.partialorder %v1557, 0.0625
      %vm1686 = vcmp.lt.f32.partialorder %v1558, 0.0625
      %vm1687 = vcmp.lt.f32.partialorder %v1559, 0.0625
      %vm1688 = vcmp.lt.f32.partialorder %v1560, 0.0625
      %vm1689 = vcmp.lt.f32.partialorder %v1561, 0.0625
      %vm1690 = vcmp.lt.f32.partialorder %v1562, 0.0625
      %vm1691 = vcmp.lt.f32.partialorder %v1563, 0.0625
      %vm1692 = vcmp.lt.f32.partialorder %v1564, 0.0625
      %vm1693 = vcmp.lt.f32.partialorder %v1565, 0.0625
      %vm1694 = vcmp.lt.f32.partialorder %v1566, 0.0625
      %vm1695 = vcmp.lt.f32.partialorder %v1567, 0.0625
      %vm1696 = vcmp.lt.f32.partialorder %v1568, 0.0625
      %vm1697 = vcmp.lt.f32.partialorder %v1569, 0.0625
      %vm1698 = vcmp.lt.f32.partialorder %v1570, 0.0625
      %vm1699 = vcmp.lt.f32.partialorder %v1571, 0.0625
      %vm1700 = vcmp.lt.f32.partialorder %v1572, 0.0625
      %vm1701 = vcmp.lt.f32.partialorder %v1573, 0.0625
      %vm1702 = vcmp.lt.f32.partialorder %v1574, 0.0625
      %vm1703 = vcmp.lt.f32.partialorder %v1575, 0.0625
      %vm1704 = vcmp.lt.f32.partialorder %v1576, 0.0625
      %vm1705 = vcmp.lt.f32.partialorder %v1577, 0.0625
      %vm1706 = vcmp.lt.f32.partialorder %v1578, 0.0625
      %vm1707 = vcmp.lt.f32.partialorder %v1579, 0.0625
      %vm1708 = vcmp.lt.f32.partialorder %v1580, 0.0625
      %vm1709 = vcmp.lt.f32.partialorder %v1581, 0.0625
      %vm1710 = vcmp.lt.f32.partialorder %v1582, 0.0625
      %vm1711 = vcmp.lt.f32.partialorder %v1583, 0.0625
      %v1712 = vld [vmem:[%s3] sm:$0xff]
      %v1714 = vlaneseq
      %v1715 = vshrl.u32 %v1714, 7
      %v1716 = vsub.s32 0, %v1715
      %v1717 = vrot.slane %v1712, %v1716
      %v1718 = vlaneseq
      %v1719 = vshrl.u32 %v1718, 7
      %v1720 = vsub.s32 1, %v1719
      %v1721 = vrot.slane %v1712, %v1720
      %v1722 = vlaneseq
      %v1723 = vshrl.u32 %v1722, 7
      %v1724 = vsub.s32 2, %v1723
      %v1725 = vrot.slane %v1712, %v1724
      %v1726 = vlaneseq
      %v1727 = vshrl.u32 %v1726, 7
      %v1728 = vsub.s32 3, %v1727
      %v1729 = vrot.slane %v1712, %v1728
      %v1730 = vlaneseq
      %v1731 = vshrl.u32 %v1730, 7
      %v1732 = vsub.s32 4, %v1731
      %v1733 = vrot.slane %v1712, %v1732
      %v1734 = vlaneseq
      %v1735 = vshrl.u32 %v1734, 7
      %v1736 = vsub.s32 5, %v1735
      %v1737 = vrot.slane %v1712, %v1736
      %v1738 = vlaneseq
      %v1739 = vshrl.u32 %v1738, 7
      %v1740 = vsub.s32 6, %v1739
      %v1741 = vrot.slane %v1712, %v1740
      %v1742 = vlaneseq
      %v1743 = vshrl.u32 %v1742, 7
      %v1744 = vsub.s32 7, %v1743
      %v1745 = vrot.slane %v1712, %v1744
      %v1754 = vsel %vm1584, %v1717, 0.0
      %v1755 = vsel %vm1585, %v1721, 0.0
      %v1756 = vsel %vm1586, %v1725, 0.0
      %v1757 = vsel %vm1587, %v1729, 0.0
      %v1758 = vsel %vm1588, %v1733, 0.0
      %v1759 = vsel %vm1589, %v1737, 0.0
      %v1760 = vsel %vm1590, %v1741, 0.0
      %v1761 = vsel %vm1591, %v1745, 0.0
      %v1762 = vsel %vm1592, %v1717, 0.0
      %v1763 = vsel %vm1593, %v1721, 0.0
      %v1764 = vsel %vm1594, %v1725, 0.0
      %v1765 = vsel %vm1595, %v1729, 0.0
      %v1766 = vsel %vm1596, %v1733, 0.0
      %v1767 = vsel %vm1597, %v1737, 0.0
      %v1768 = vsel %vm1598, %v1741, 0.0
      %v1769 = vsel %vm1599, %v1745, 0.0
      %v1770 = vsel %vm1600, %v1717, 0.0
      %v1771 = vsel %vm1601, %v1721, 0.0
      %v1772 = vsel %vm1602, %v1725, 0.0
      %v1773 = vsel %vm1603, %v1729, 0.0
      %v1774 = vsel %vm1604, %v1733, 0.0
      %v1775 = vsel %vm1605, %v1737, 0.0
      %v1776 = vsel %vm1606, %v1741, 0.0
      %v1777 = vsel %vm1607, %v1745, 0.0
      %v1778 = vsel %vm1608, %v1717, 0.0
      %v1779 = vsel %vm1609, %v1721, 0.0
      %v1780 = vsel %vm1610, %v1725, 0.0
      %v1781 = vsel %vm1611, %v1729, 0.0
      %v1782 = vsel %vm1612, %v1733, 0.0
      %v1783 = vsel %vm1613, %v1737, 0.0
      %v1784 = vsel %vm1614, %v1741, 0.0
      %v1785 = vsel %vm1615, %v1745, 0.0
      %v1786 = vsel %vm1616, %v1717, 0.0
      %v1787 = vsel %vm1617, %v1721, 0.0
      %v1788 = vsel %vm1618, %v1725, 0.0
      %v1789 = vsel %vm1619, %v1729, 0.0
      %v1790 = vsel %vm1620, %v1733, 0.0
      %v1791 = vsel %vm1621, %v1737, 0.0
      %v1792 = vsel %vm1622, %v1741, 0.0
      %v1793 = vsel %vm1623, %v1745, 0.0
      %v1794 = vsel %vm1624, %v1717, 0.0
      %v1795 = vsel %vm1625, %v1721, 0.0
      %v1796 = vsel %vm1626, %v1725, 0.0
      %v1797 = vsel %vm1627, %v1729, 0.0
      %v1798 = vsel %vm1628, %v1733, 0.0
      %v1799 = vsel %vm1629, %v1737, 0.0
      %v1800 = vsel %vm1630, %v1741, 0.0
      %v1801 = vsel %vm1631, %v1745, 0.0
      %v1802 = vsel %vm1632, %v1717, 0.0
      %v1803 = vsel %vm1633, %v1721, 0.0
      %v1804 = vsel %vm1634, %v1725, 0.0
      %v1805 = vsel %vm1635, %v1729, 0.0
      %v1806 = vsel %vm1636, %v1733, 0.0
      %v1807 = vsel %vm1637, %v1737, 0.0
      %v1808 = vsel %vm1638, %v1741, 0.0
      %v1809 = vsel %vm1639, %v1745, 0.0
      %v1810 = vsel %vm1640, %v1717, 0.0
      %v1811 = vsel %vm1641, %v1721, 0.0
      %v1812 = vsel %vm1642, %v1725, 0.0
      %v1813 = vsel %vm1643, %v1729, 0.0
      %v1814 = vsel %vm1644, %v1733, 0.0
      %v1815 = vsel %vm1645, %v1737, 0.0
      %v1816 = vsel %vm1646, %v1741, 0.0
      %v1817 = vsel %vm1647, %v1745, 0.0
      %v1818 = vsel %vm1648, %v1717, 0.0
      %v1819 = vsel %vm1649, %v1721, 0.0
      %v1820 = vsel %vm1650, %v1725, 0.0
      %v1821 = vsel %vm1651, %v1729, 0.0
      %v1822 = vsel %vm1652, %v1733, 0.0
      %v1823 = vsel %vm1653, %v1737, 0.0
      %v1824 = vsel %vm1654, %v1741, 0.0
      %v1825 = vsel %vm1655, %v1745, 0.0
      %v1826 = vsel %vm1656, %v1717, 0.0
      %v1827 = vsel %vm1657, %v1721, 0.0
      %v1828 = vsel %vm1658, %v1725, 0.0
      %v1829 = vsel %vm1659, %v1729, 0.0
      %v1830 = vsel %vm1660, %v1733, 0.0
      %v1831 = vsel %vm1661, %v1737, 0.0
      %v1832 = vsel %vm1662, %v1741, 0.0
      %v1833 = vsel %vm1663, %v1745, 0.0
      %v1834 = vsel %vm1664, %v1717, 0.0
      %v1835 = vsel %vm1665, %v1721, 0.0
      %v1836 = vsel %vm1666, %v1725, 0.0
      %v1837 = vsel %vm1667, %v1729, 0.0
      %v1838 = vsel %vm1668, %v1733, 0.0
      %v1839 = vsel %vm1669, %v1737, 0.0
      %v1840 = vsel %vm1670, %v1741, 0.0
      %v1841 = vsel %vm1671, %v1745, 0.0
      %v1842 = vsel %vm1672, %v1717, 0.0
      %v1843 = vsel %vm1673, %v1721, 0.0
      %v1844 = vsel %vm1674, %v1725, 0.0
      %v1845 = vsel %vm1675, %v1729, 0.0
      %v1846 = vsel %vm1676, %v1733, 0.0
      %v1847 = vsel %vm1677, %v1737, 0.0
      %v1848 = vsel %vm1678, %v1741, 0.0
      %v1849 = vsel %vm1679, %v1745, 0.0
      %v1850 = vsel %vm1680, %v1717, 0.0
      %v1851 = vsel %vm1681, %v1721, 0.0
      %v1852 = vsel %vm1682, %v1725, 0.0
      %v1853 = vsel %vm1683, %v1729, 0.0
      %v1854 = vsel %vm1684, %v1733, 0.0
      %v1855 = vsel %vm1685, %v1737, 0.0
      %v1856 = vsel %vm1686, %v1741, 0.0
      %v1857 = vsel %vm1687, %v1745, 0.0
      %v1858 = vsel %vm1688, %v1717, 0.0
      %v1859 = vsel %vm1689, %v1721, 0.0
      %v1860 = vsel %vm1690, %v1725, 0.0
      %v1861 = vsel %vm1691, %v1729, 0.0
      %v1862 = vsel %vm1692, %v1733, 0.0
      %v1863 = vsel %vm1693, %v1737, 0.0
      %v1864 = vsel %vm1694, %v1741, 0.0
      %v1865 = vsel %vm1695, %v1745, 0.0
      %v1866 = vsel %vm1696, %v1717, 0.0
      %v1867 = vsel %vm1697, %v1721, 0.0
      %v1868 = vsel %vm1698, %v1725, 0.0
      %v1869 = vsel %vm1699, %v1729, 0.0
      %v1870 = vsel %vm1700, %v1733, 0.0
      %v1871 = vsel %vm1701, %v1737, 0.0
      %v1872 = vsel %vm1702, %v1741, 0.0
      %v1873 = vsel %vm1703, %v1745, 0.0
      %v1874 = vsel %vm1704, %v1717, 0.0
      %v1875 = vsel %vm1705, %v1721, 0.0
      %v1876 = vsel %vm1706, %v1725, 0.0
      %v1877 = vsel %vm1707, %v1729, 0.0
      %v1878 = vsel %vm1708, %v1733, 0.0
      %v1879 = vsel %vm1709, %v1737, 0.0
      %v1880 = vsel %vm1710, %v1741, 0.0
      %v1881 = vsel %vm1711, %v1745, 0.0
      %v1882 = vadd.f32 %v1754, %v1755
      %v1883 = vadd.f32 %v1882, %v1756
      %v1884 = vadd.f32 %v1883, %v1757
      %v1885 = vadd.f32 %v1884, %v1758
      %v1886 = vadd.f32 %v1885, %v1759
      %v1887 = vadd.f32 %v1886, %v1760
      %v1888 = vadd.f32 %v1887, %v1761
      %1889 = vadd.xlane.f32.xlu0 %v1888
      %v1890 = vpop.xlane.xlu0 %1889
      %v1891 = vadd.f32 %v1762, %v1763
      %v1892 = vadd.f32 %v1891, %v1764
      %v1893 = vadd.f32 %v1892, %v1765
      %v1894 = vadd.f32 %v1893, %v1766
      %v1895 = vadd.f32 %v1894, %v1767
      %v1896 = vadd.f32 %v1895, %v1768
      %v1897 = vadd.f32 %v1896, %v1769
      %1898 = vadd.xlane.f32.xlu0 %v1897
      %v1899 = vpop.xlane.xlu0 %1898
      %v1900 = vadd.f32 %v1770, %v1771
      %v1901 = vadd.f32 %v1900, %v1772
      %v1902 = vadd.f32 %v1901, %v1773
      %v1903 = vadd.f32 %v1902, %v1774
      %v1904 = vadd.f32 %v1903, %v1775
      %v1905 = vadd.f32 %v1904, %v1776
      %v1906 = vadd.f32 %v1905, %v1777
      %1907 = vadd.xlane.f32.xlu0 %v1906
      %v1908 = vpop.xlane.xlu0 %1907
      %v1909 = vadd.f32 %v1778, %v1779
      %v1910 = vadd.f32 %v1909, %v1780
      %v1911 = vadd.f32 %v1910, %v1781
      %v1912 = vadd.f32 %v1911, %v1782
      %v1913 = vadd.f32 %v1912, %v1783
      %v1914 = vadd.f32 %v1913, %v1784
      %v1915 = vadd.f32 %v1914, %v1785
      %1916 = vadd.xlane.f32.xlu0 %v1915
      %v1917 = vpop.xlane.xlu0 %1916
      %v1918 = vadd.f32 %v1786, %v1787
      %v1919 = vadd.f32 %v1918, %v1788
      %v1920 = vadd.f32 %v1919, %v1789
      %v1921 = vadd.f32 %v1920, %v1790
      %v1922 = vadd.f32 %v1921, %v1791
      %v1923 = vadd.f32 %v1922, %v1792
      %v1924 = vadd.f32 %v1923, %v1793
      %1925 = vadd.xlane.f32.xlu0 %v1924
      %v1926 = vpop.xlane.xlu0 %1925
      %v1927 = vadd.f32 %v1794, %v1795
      %v1928 = vadd.f32 %v1927, %v1796
      %v1929 = vadd.f32 %v1928, %v1797
      %v1930 = vadd.f32 %v1929, %v1798
      %v1931 = vadd.f32 %v1930, %v1799
      %v1932 = vadd.f32 %v1931, %v1800
      %v1933 = vadd.f32 %v1932, %v1801
      %1934 = vadd.xlane.f32.xlu0 %v1933
      %v1935 = vpop.xlane.xlu0 %1934
      %v1936 = vadd.f32 %v1802, %v1803
      %v1937 = vadd.f32 %v1936, %v1804
      %v1938 = vadd.f32 %v1937, %v1805
      %v1939 = vadd.f32 %v1938, %v1806
      %v1940 = vadd.f32 %v1939, %v1807
      %v1941 = vadd.f32 %v1940, %v1808
      %v1942 = vadd.f32 %v1941, %v1809
      %1943 = vadd.xlane.f32.xlu0 %v1942
      %v1944 = vpop.xlane.xlu0 %1943
      %v1945 = vadd.f32 %v1810, %v1811
      %v1946 = vadd.f32 %v1945, %v1812
      %v1947 = vadd.f32 %v1946, %v1813
      %v1948 = vadd.f32 %v1947, %v1814
      %v1949 = vadd.f32 %v1948, %v1815
      %v1950 = vadd.f32 %v1949, %v1816
      %v1951 = vadd.f32 %v1950, %v1817
      %1952 = vadd.xlane.f32.xlu0 %v1951
      %v1953 = vpop.xlane.xlu0 %1952
      %v1954 = vadd.f32 %v1818, %v1819
      %v1955 = vadd.f32 %v1954, %v1820
      %v1956 = vadd.f32 %v1955, %v1821
      %v1957 = vadd.f32 %v1956, %v1822
      %v1958 = vadd.f32 %v1957, %v1823
      %v1959 = vadd.f32 %v1958, %v1824
      %v1960 = vadd.f32 %v1959, %v1825
      %1961 = vadd.xlane.f32.xlu0 %v1960
      %v1962 = vpop.xlane.xlu0 %1961
      %v1963 = vadd.f32 %v1826, %v1827
      %v1964 = vadd.f32 %v1963, %v1828
      %v1965 = vadd.f32 %v1964, %v1829
      %v1966 = vadd.f32 %v1965, %v1830
      %v1967 = vadd.f32 %v1966, %v1831
      %v1968 = vadd.f32 %v1967, %v1832
      %v1969 = vadd.f32 %v1968, %v1833
      %1970 = vadd.xlane.f32.xlu0 %v1969
      %v1971 = vpop.xlane.xlu0 %1970
      %v1972 = vadd.f32 %v1834, %v1835
      %v1973 = vadd.f32 %v1972, %v1836
      %v1974 = vadd.f32 %v1973, %v1837
      %v1975 = vadd.f32 %v1974, %v1838
      %v1976 = vadd.f32 %v1975, %v1839
      %v1977 = vadd.f32 %v1976, %v1840
      %v1978 = vadd.f32 %v1977, %v1841
      %1979 = vadd.xlane.f32.xlu0 %v1978
      %v1980 = vpop.xlane.xlu0 %1979
      %v1981 = vadd.f32 %v1842, %v1843
      %v1982 = vadd.f32 %v1981, %v1844
      %v1983 = vadd.f32 %v1982, %v1845
      %v1984 = vadd.f32 %v1983, %v1846
      %v1985 = vadd.f32 %v1984, %v1847
      %v1986 = vadd.f32 %v1985, %v1848
      %v1987 = vadd.f32 %v1986, %v1849
      %1988 = vadd.xlane.f32.xlu0 %v1987
      %v1989 = vpop.xlane.xlu0 %1988
      %v1990 = vadd.f32 %v1850, %v1851
      %v1991 = vadd.f32 %v1990, %v1852
      %v1992 = vadd.f32 %v1991, %v1853
      %v1993 = vadd.f32 %v1992, %v1854
      %v1994 = vadd.f32 %v1993, %v1855
      %v1995 = vadd.f32 %v1994, %v1856
      %v1996 = vadd.f32 %v1995, %v1857
      %1997 = vadd.xlane.f32.xlu0 %v1996
      %v1998 = vpop.xlane.xlu0 %1997
      %v1999 = vadd.f32 %v1858, %v1859
      %v2000 = vadd.f32 %v1999, %v1860
      %v2001 = vadd.f32 %v2000, %v1861
      %v2002 = vadd.f32 %v2001, %v1862
      %v2003 = vadd.f32 %v2002, %v1863
      %v2004 = vadd.f32 %v2003, %v1864
      %v2005 = vadd.f32 %v2004, %v1865
      %2006 = vadd.xlane.f32.xlu0 %v2005
      %v2007 = vpop.xlane.xlu0 %2006
      %v2008 = vadd.f32 %v1866, %v1867
      %v2009 = vadd.f32 %v2008, %v1868
      %v2010 = vadd.f32 %v2009, %v1869
      %v2011 = vadd.f32 %v2010, %v1870
      %v2012 = vadd.f32 %v2011, %v1871
      %v2013 = vadd.f32 %v2012, %v1872
      %v2014 = vadd.f32 %v2013, %v1873
      %2015 = vadd.xlane.f32.xlu0 %v2014
      %v2016 = vpop.xlane.xlu0 %2015
      %v2017 = vadd.f32 %v1874, %v1875
      %v2018 = vadd.f32 %v2017, %v1876
      %v2019 = vadd.f32 %v2018, %v1877
      %v2020 = vadd.f32 %v2019, %v1878
      %v2021 = vadd.f32 %v2020, %v1879
      %v2022 = vadd.f32 %v2021, %v1880
      %v2023 = vadd.f32 %v2022, %v1881
      %2024 = vadd.xlane.f32.xlu0 %v2023
      %v2025 = vpop.xlane.xlu0 %2024
      %vm2026 = vcmask 7168
      %2027 = vst.msk [vmem:[%s199] sm:$0xff] %vm2026, %v1890
      %2028 = vst.msk [vmem:[%s199 + $0x8] sm:$0xff] %vm2026, %v1899
      %2029 = vst.msk [vmem:[%s199 + $0x10] sm:$0xff] %vm2026, %v1908
      %2030 = vst.msk [vmem:[%s199 + $0x18] sm:$0xff] %vm2026, %v1917
      %2031 = vst.msk [vmem:[%s199 + $0x20] sm:$0xff] %vm2026, %v1926
      %2032 = vst.msk [vmem:[%s199 + $0x28] sm:$0xff] %vm2026, %v1935
      %2033 = vst.msk [vmem:[%s199 + $0x30] sm:$0xff] %vm2026, %v1944
      %2034 = vst.msk [vmem:[%s199 + $0x38] sm:$0xff] %vm2026, %v1953
      %2035 = vst.msk [vmem:[%s199 + $0x40] sm:$0xff] %vm2026, %v1962
      %2036 = vst.msk [vmem:[%s199 + $0x48] sm:$0xff] %vm2026, %v1971
      %2037 = vst.msk [vmem:[%s199 + $0x50] sm:$0xff] %vm2026, %v1980
      %2038 = vst.msk [vmem:[%s199 + $0x58] sm:$0xff] %vm2026, %v1989
      %2039 = vst.msk [vmem:[%s199 + $0x60] sm:$0xff] %vm2026, %v1998
      %2040 = vst.msk [vmem:[%s199 + $0x68] sm:$0xff] %vm2026, %v2007
      %2041 = vst.msk [vmem:[%s199 + $0x70] sm:$0xff] %vm2026, %v2016
      %2042 = vst.msk [vmem:[%s199 + $0x78] sm:$0xff] %vm2026, %v2025
      %s2043 = smul.u32 16, %s15
      %p2044 = scmp.lt.s32.totalorder %s2043, 127
      %s2045 = scalar_select %p2044, %s2043, 127
      %s2046 = smul.addr %s2045, 8
      %s2047 = scalar_lea.vmem %s4, %s2046
      // Predicated region
      $region37: #{tpu_custom_call.1} parent=35 // pred_check
        %p2048 = pneg %p122
      $region38: #{tpu_custom_call.1} parent=35 // pred_check_branch
        %2050 = sbr.rel (%p2048) target = $region40
      $region39: #{tpu_custom_call.1} parent=35 // pred_region
        %s2051 = smul.u32 16, %s15
      $region40: #{tpu_custom_call.1} parent=35 // pred_fallthru
        _
    $region36: #{tpu_custom_call.1} parent=5 // pred_fallthru
      _
    %p2052 = scmp.le.s32.totalorder 2, %s10
    // Predicated region
    $region41: #{tpu_custom_call.1} parent=5 // pred_check
      %p2053 = pneg %p2052
    $region42: #{tpu_custom_call.1} parent=5 // pred_check_branch
      %2055 = sbr.rel (%p2053) target = $region44
    $region43: #{tpu_custom_call.1} parent=5 // pred_region
      %s2056 = ssub.s32 %s10, 2
      // Predicated region
      $region45: #{tpu_custom_call.1} parent=43 // pred_check
        %p2057 = pneg %p128
      $region46: #{tpu_custom_call.1} parent=43 // pred_check_branch
        %2059 = sbr.rel (%p2057) target = $region48
      $region47: #{tpu_custom_call.1} parent=43 // pred_region
        %s2060 = smul.u32 16, %s16
        %p2061 = scmp.lt.s32.totalorder %s2060, 127
        %s2062 = scalar_select %p2061, %s2060, 127
        %s2063 = smul.addr %s2062, 8
        %s2064 = scalar_lea.vmem %s4, %s2063
      $region48: #{tpu_custom_call.1} parent=43 // pred_fallthru
        _
    $region44: #{tpu_custom_call.1} parent=5 // pred_fallthru
      _
  $region6: #{tpu_custom_call.1} parent=0 // loop_footer
    %s14 = sadd.s32 1, %s10
  $region7: #{tpu_custom_call.1} parent=0 // loop_footer_branch
    %9 = sbr.rel target = $region3
  $region8: #{tpu_custom_call.1} parent=0 // loop_exit
    _

</llo_original>
